<compile_context>
chip_gen: v6e
topology: v6e:2x2x1
jax: 0.10.0
libtpu: 0.0.40
codegen_flags: <defaults>
</compile_context>

<pallas_src>
import jax
import jax.numpy as jnp
from jax.experimental import pallas as pl
from jax.experimental.pallas import tpu as pltpu

# ----------------------------- model sizes ---------------------------------
VOCAB_SIZE = 4     # sample-id vocabulary
TOKEN_NUM  = 8     # number of expression tokens (phosphosites)
HIDDEN_DIM = 32    # embedding width
NUM_BINS   = 16    # AutoDis meta-embedding bins
DROPOUT_P  = 0.1   # unused at inference (identity)

HP = jax.lax.Precision.HIGHEST   # exact f32 MXU passes; MXU has huge slack here


# ------------------------------- kernel ------------------------------------
def embedding_kernel(pad_ref,      # SMEM (1,)          f32  [padding_value]
                     packed_ref,   # VMEM (BT, T+H)     f32  [matrix | semb] per row
                     wb_ref,       # VMEM (2, T*K)      f32  rows = [W/alpha, B/alpha] flat
                     rep_ref,      # VMEM (T+H, T*K)    f32  repeat-each-token-K-times (0/1)
                     ones_ref,     # VMEM (T*K, T*K)    f32  block-diag ones (softmax sum+bcast)
                     meta_ref,     # VMEM (T*K, T*H)    f32  block-diag AutoDis meta
                     tile_ref,     # VMEM (T+H, T*H)    f32  tiled identity on semb rows
                     x_ref,        # VMEM (BT, T*H)     f32  out
                     autodis_ref,  # VMEM (BT, T*H)     f32  out
                     binw_ref):    # VMEM (BT, T*K)     f32  out
    pad = pad_ref[0]
    packed = packed_ref[...]                                     # (BT, T+H)

    # Token values broadcast to lane-dense (BT, T*K) via a tiny MXU matmul
    # (the semb columns of `packed` hit zero rows of rep_ref, so they drop out).
    v_rep = jnp.dot(packed, rep_ref[...], precision=HP,
                    preferred_element_type=jnp.float32)          # (BT, T*K)

    wb = wb_ref[...]                                             # (2, T*K)
    scores = v_rep * wb[0:1, :] + wb[1:2, :]                     # 1/alpha pre-folded

    # Per-token softmax at full 128-lane width.  Subtracting the ROW max (a
    # per-row constant) is mathematically identical to per-token max
    # subtraction and keeps exp() <= 1; the per-token sum and its broadcast
    # back to all K bins is one block-diagonal-ones MXU matmul.
    rmax = jnp.max(scores, axis=-1, keepdims=True)               # (BT, 1)
    e = jnp.exp(scores - rmax)                                   # (BT, T*K) full width
    denom = jnp.dot(e, ones_ref[...], precision=HP,
                    preferred_element_type=jnp.float32)          # (BT, T*K)
    binw = jnp.where(v_rep != pad, e / denom, 0.0)               # padding mask

    # AutoDis contraction and sample-embedding broadcast: lane-dense MXU matmuls.
    autodis = jnp.dot(binw, meta_ref[...], precision=HP,
                      preferred_element_type=jnp.float32)        # (BT, T*H)
    semb_t = jnp.dot(packed, tile_ref[...], precision=HP,
                     preferred_element_type=jnp.float32)         # (BT, T*H)

    # TODO(synk): training-mode stochastic dropout (pltpu.prng_*) not wired (eval = identity).
    x_ref[...] = autodis + semb_t
    autodis_ref[...] = autodis
    binw_ref[...] = binw


# --------------------- one-time derived constants ---------------------------
def make_embedding_constants(params, alpha):
    """Hoisted out of the per-call path; reuse the returned dict across calls."""
    T, K = params["score_w"].shape
    _, H = params["emb_table"].shape
    f32 = jnp.float32

    inv_alpha = 1.0 / jnp.asarray(alpha, f32)
    w = (params["score_w"].astype(f32) * inv_alpha).reshape(1, T * K)
    b = (params["score_b"].astype(f32) * inv_alpha).reshape(1, T * K)
    wb = jnp.concatenate([w, b], axis=0)                                 # (2, T*K)

    eye_t = jnp.eye(T, dtype=f32)
    rep = jnp.repeat(eye_t, K, axis=1)                                   # (T, T*K)
    rep_pad = jnp.concatenate([rep, jnp.zeros((H, T * K), f32)], axis=0) # (T+H, T*K)

    ones_bd = jnp.kron(eye_t, jnp.ones((K, K), f32))                     # (T*K, T*K)

    meta = params["meta"].astype(f32)
    meta_bd = jnp.einsum("tkh,ts->tksh", meta, eye_t).reshape(T * K, T * H)

    tile = jnp.tile(jnp.eye(H, dtype=f32), (1, T))                       # (H, T*H)
    tile_pad = jnp.concatenate([jnp.zeros((T, T * H), f32), tile], axis=0)

    return {
        "wb": wb, "rep_pad": rep_pad, "ones_bd": ones_bd,
        "meta_bd": meta_bd, "tile_pad": tile_pad,
        "emb_table": params["emb_table"].astype(f32),
        "T": T, "K": K, "H": H,
    }


# ------------------------------ wrapper -------------------------------------
def embedding_forward(samples, matrix, alpha, padding_value, params,
                      consts=None, *, block_b=2048):
    """samples: (B,) int; matrix: (B, T) f32.  Returns (x, autodis, bin_weights, semb)."""
    if consts is None:
        consts = make_embedding_constants(params, alpha)
    T, K, H = consts["T"], consts["K"], consts["H"]
    B = matrix.shape[0]

    matrix = matrix.astype(jnp.float32)
    samples = samples.astype(jnp.int32)

    # Sample-embedding lookup: trivial XLA gather in the wrapper.
    semb = consts["emb_table"][samples]                                  # (B, H)

    # Single packed per-row input -> one input DMA per grid step.
    packed = jnp.concatenate([matrix, semb], axis=1)                     # (B, T+H)

    # Batch tiling: large tiles amortise the ~0.35 us per-grid-step overhead.
    # BT=2048 keeps double-buffered I/O ~12 MiB (safe on v5e/v6e/v7x with the
    # explicit 32 MiB VMEM limit below); raise block_b to 4096 on v6e/v7x if desired.
    if B <= block_b:
        BT, Bp = B, B
    else:
        BT = max(8, (block_b // 8) * 8)
        Bp = -(-B // BT) * BT
    if Bp != B:
        packed = jnp.pad(packed, ((0, Bp - B), (0, 0)),
                         constant_values=float(padding_value))

    pad_scalar = jnp.full((1,), padding_value, jnp.float32)

    grid_spec = pltpu.PrefetchScalarGridSpec(
        num_scalar_prefetch=0,
        grid=(Bp // BT,),
        in_specs=[
            pl.BlockSpec(memory_space=pltpu.MemorySpace.SMEM),            # padding scalar
            pl.BlockSpec((BT, T + H),    lambda i: (i, 0)),               # packed batch tile
            pl.BlockSpec((2, T * K),     lambda i: (0, 0)),               # wb       (resident)
            pl.BlockSpec((T + H, T * K), lambda i: (0, 0)),               # rep_pad  (resident)
            pl.BlockSpec((T * K, T * K), lambda i: (0, 0)),               # ones_bd  (resident)
            pl.BlockSpec((T * K, T * H), lambda i: (0, 0)),               # meta_bd  (resident)
            pl.BlockSpec((T + H, T * H), lambda i: (0, 0)),               # tile_pad (resident)
        ],
        out_specs=[
            pl.BlockSpec((BT, T * H), lambda i: (i, 0)),                  # x (lane-dense)
            pl.BlockSpec((BT, T * H), lambda i: (i, 0)),                  # autodis
            pl.BlockSpec((BT, T * K), lambda i: (i, 0)),                  # bin_weights
        ],
    )

    out_shape = (
        jax.ShapeDtypeStruct((Bp, T * H), jnp.float32),
        jax.ShapeDtypeStruct((Bp, T * H), jnp.float32),
        jax.ShapeDtypeStruct((Bp, T * K), jnp.float32),
    )

    # Advisory cost estimate: the kernel is output-write bandwidth bound
    # (~2.56 KB written vs ~160 B read per row).
    cost = pl.CostEstimate(
        flops=2 * Bp * ((T + H) * T * K + (T * K) * (T * K)
                        + (T * K) * (T * H) + (T + H) * (T * H)),
        transcendentals=Bp * T * K,
        bytes_accessed=4 * Bp * ((T + H) + 2 * T * H + T * K),
    )

    x_flat, autodis_flat, binw_flat = pl.pallas_call(
        embedding_kernel,
        out_shape=out_shape,
        grid_spec=grid_spec,
        compiler_params=pltpu.CompilerParams(
            dimension_semantics=("parallel",),      # batch tiles independent (v7x: 2 TCs)
            vmem_limit_bytes=32 * 1024 * 1024),
        cost_estimate=cost,
    )(pad_scalar, packed, consts["wb"], consts["rep_pad"], consts["ones_bd"],
      consts["meta_bd"], consts["tile_pad"])

    x       = x_flat[:B].reshape(B, T, H)
    autodis = autodis_flat[:B].reshape(B, T, H)
    binw    = binw_flat[:B].reshape(B, T, K)
    return x, autodis, binw, semb[:, None, :]


# --------------------------- pure-JAX reference ------------------------------
def reference_forward(samples, matrix, alpha, padding_value, params):
    semb = params["emb_table"][samples][:, None, :]                     # (B,1,H)
    v = matrix[:, :, None]                                              # (B,T,1)
    scores = (v * params["score_w"][None] + params["score_b"][None]) / alpha
    binw = jax.nn.softmax(scores, axis=-1)
    binw = jnp.where(v != padding_value, binw, 0.0)
    autodis = jnp.einsum("btk,tkh->bth", binw, params["meta"],
                         precision=jax.lax.Precision.HIGHEST)
    x = semb + autodis
    return x, autodis, binw, semb


# --------------------------------- main --------------------------------------
if __name__ == "__main__":
    key = jax.random.PRNGKey(0)
    k1, k2, k3, k4, k5, k6, k7, k8 = jax.random.split(key, 8)

    params = {
        "emb_table": jax.random.normal(k1, (VOCAB_SIZE, HIDDEN_DIM), jnp.float32) * 0.02,
        "score_w":   jax.random.normal(k2, (TOKEN_NUM, NUM_BINS), jnp.float32),
        "score_b":   jax.random.normal(k3, (TOKEN_NUM, NUM_BINS), jnp.float32) * 0.1,
        "meta":      jax.random.normal(k4, (TOKEN_NUM, NUM_BINS, HIDDEN_DIM), jnp.float32) * 0.02,
    }

    padding_value = -1.0
    alpha = 0.5
    names = ("x", "autodis", "bin_weights", "semb")

    # One-time constant prep (reused across calls).
    consts = make_embedding_constants(params, alpha)

    # --- case 1: tiny batch (single grid step) ---
    B = 2
    samples = jax.random.randint(k5, (B,), 0, VOCAB_SIZE, jnp.int32)
    matrix  = jax.random.normal(k6, (B, TOKEN_NUM), jnp.float32)
    matrix  = matrix.at[0, 3].set(padding_value).at[1, 7].set(padding_value)

    outs = jax.block_until_ready(
        embedding_forward(samples, matrix, alpha, padding_value, params, consts))
    refs = reference_forward(samples, matrix, alpha, padding_value, params)
    for name, o, r in zip(names, outs, refs):
        assert o.shape == r.shape, (name, o.shape, r.shape)
        assert jnp.allclose(o, r, atol=1e-5, rtol=1e-5), name

    # --- case 2: batch tiling + padding path (multi grid step, BT=8) ---
    B2 = 19
    samples2 = jax.random.randint(k7, (B2,), 0, VOCAB_SIZE, jnp.int32)
    matrix2  = jax.random.normal(k8, (B2, TOKEN_NUM), jnp.float32)
    matrix2  = matrix2.at[5, 2].set(padding_value).at[11, 0].set(padding_value)

    outs2 = jax.block_until_ready(
        embedding_forward(samples2, matrix2, alpha, padding_value, params,
                          consts, block_b=8))
    refs2 = reference_forward(samples2, matrix2, alpha, padding_value, params)
    for name, o, r in zip(names, outs2, refs2):
        assert o.shape == r.shape, (name, o.shape, r.shape)
        assert jnp.allclose(o, r, atol=1e-5, rtol=1e-5), name

    print("KERNEL_OK")
</pallas_src>

<mosaic_0001>
module attributes {stable_mosaic.version = 11 : i64} {
  func.func @embedding_kernel(%arg0: i32, %arg1: memref<1xf32, #tpu.memory_space<smem>>, %arg2: memref<2x40xf32, #tpu.memory_space<vmem>>, %arg3: memref<2x128xf32, #tpu.memory_space<vmem>>, %arg4: memref<40x128xf32, #tpu.memory_space<vmem>>, %arg5: memref<128x128xf32, #tpu.memory_space<vmem>>, %arg6: memref<128x256xf32, #tpu.memory_space<vmem>>, %arg7: memref<40x256xf32, #tpu.memory_space<vmem>>, %arg8: memref<2x256xf32, #tpu.memory_space<vmem>>, %arg9: memref<2x256xf32, #tpu.memory_space<vmem>>, %arg10: memref<2x128xf32, #tpu.memory_space<vmem>>) attributes {dimension_semantics = [#tpu.dimension_semantics<parallel>], iteration_bounds = array<i64: 1>, scalar_prefetch = 0 : i64, scratch_operands = 0 : i64, tpu.core_type = #tpu.core_type<tc>, window_params = [{transform_indices = @transform_0, window_bounds = array<i64: 1>}, {transform_indices = @transform_1, window_bounds = array<i64: 2, 40>}, {pipeline_mode = #tpu.pipeline_mode<synchronous>, transform_indices = @transform_2, window_bounds = array<i64: 2, 128>}, {pipeline_mode = #tpu.pipeline_mode<synchronous>, transform_indices = @transform_3, window_bounds = array<i64: 40, 128>}, {pipeline_mode = #tpu.pipeline_mode<synchronous>, transform_indices = @transform_4, window_bounds = array<i64: 128, 128>}, {pipeline_mode = #tpu.pipeline_mode<synchronous>, transform_indices = @transform_5, window_bounds = array<i64: 128, 256>}, {pipeline_mode = #tpu.pipeline_mode<synchronous>, transform_indices = @transform_6, window_bounds = array<i64: 40, 256>}, {transform_indices = @transform_7, window_bounds = array<i64: 2, 256>}, {transform_indices = @transform_8, window_bounds = array<i64: 2, 256>}, {transform_indices = @transform_9, window_bounds = array<i64: 2, 128>}]} {
    %c0 = arith.constant 0 : index
    %0 = memref.load %arg1[%c0] : memref<1xf32, #tpu.memory_space<smem>>
    %c0_0 = arith.constant 0 : index
    %c0_1 = arith.constant 0 : index
    %1 = vector.load %arg2[%c0_0, %c0_1] : memref<2x40xf32, #tpu.memory_space<vmem>>, vector<2x40xf32>
    %c0_2 = arith.constant 0 : index
    %c0_3 = arith.constant 0 : index
    %2 = vector.load %arg4[%c0_2, %c0_3] : memref<40x128xf32, #tpu.memory_space<vmem>>, vector<40x128xf32>
    %cst = arith.constant dense<0.000000e+00> : vector<2x128xf32>
    %3 = tpu.matmul %1, %2, %cst {dimension_numbers = #tpu.dot_dimension_numbers<[1], [0], [0], [1], [0, 0, 1, 1], [], []>, precision = #tpu.contract_precision<fp32>} : vector<2x40xf32>, vector<40x128xf32>, vector<2x128xf32> -> vector<2x128xf32>
    %c0_4 = arith.constant 0 : index
    %c0_5 = arith.constant 0 : index
    %4 = vector.load %arg3[%c0_4, %c0_5] : memref<2x128xf32, #tpu.memory_space<vmem>>, vector<2x128xf32>
    %5 = vector.extract_strided_slice %4 {offsets = [0, 0], sizes = [1, 128], strides = [1, 1]} : vector<2x128xf32> to vector<1x128xf32>
    %6 = vector.broadcast %5 : vector<1x128xf32> to vector<2x128xf32>
    %7 = arith.mulf %3, %6 : vector<2x128xf32>
    %8 = vector.extract_strided_slice %4 {offsets = [1, 0], sizes = [1, 128], strides = [1, 1]} : vector<2x128xf32> to vector<1x128xf32>
    %9 = vector.broadcast %8 : vector<1x128xf32> to vector<2x128xf32>
    %10 = arith.addf %7, %9 : vector<2x128xf32>
    %cst_6 = arith.constant dense<0xFF800000> : vector<2xf32>
    %11 = vector.multi_reduction <maximumf>, %10, %cst_6 [1] : vector<2x128xf32> to vector<2xf32>
    %12 = vector.shape_cast %11 : vector<2xf32> to vector<2x1xf32>
    %13 = vector.broadcast %12 : vector<2x1xf32> to vector<2x128xf32>
    %14 = arith.subf %10, %13 : vector<2x128xf32>
    %15 = math.exp %14 : vector<2x128xf32>
    %c0_7 = arith.constant 0 : index
    %c0_8 = arith.constant 0 : index
    %16 = vector.load %arg5[%c0_7, %c0_8] : memref<128x128xf32, #tpu.memory_space<vmem>>, vector<128x128xf32>
    %cst_9 = arith.constant dense<0.000000e+00> : vector<2x128xf32>
    %17 = tpu.matmul %15, %16, %cst_9 {dimension_numbers = #tpu.dot_dimension_numbers<[1], [0], [0], [1], [0, 0, 1, 1], [], []>, precision = #tpu.contract_precision<fp32>} : vector<2x128xf32>, vector<128x128xf32>, vector<2x128xf32> -> vector<2x128xf32>
    %18 = vector.broadcast %0 : f32 to vector<2x128xf32>
    %19 = arith.cmpf one, %3, %18 : vector<2x128xf32>
    %20 = arith.divf %15, %17 : vector<2x128xf32>
    %cst_10 = arith.constant 0.000000e+00 : f32
    %21 = vector.broadcast %cst_10 : f32 to vector<2x128xf32>
    %22 = arith.select %19, %20, %21 : vector<2x128xi1>, vector<2x128xf32>
    %c0_11 = arith.constant 0 : index
    %c0_12 = arith.constant 0 : index
    %23 = vector.load %arg6[%c0_11, %c0_12] : memref<128x256xf32, #tpu.memory_space<vmem>>, vector<128x256xf32>
    %cst_13 = arith.constant dense<0.000000e+00> : vector<2x256xf32>
    %24 = tpu.matmul %22, %23, %cst_13 {dimension_numbers = #tpu.dot_dimension_numbers<[1], [0], [0], [1], [0, 0, 1, 1], [], []>, precision = #tpu.contract_precision<fp32>} : vector<2x128xf32>, vector<128x256xf32>, vector<2x256xf32> -> vector<2x256xf32>
    %c0_14 = arith.constant 0 : index
    %c0_15 = arith.constant 0 : index
    %25 = vector.load %arg7[%c0_14, %c0_15] : memref<40x256xf32, #tpu.memory_space<vmem>>, vector<40x256xf32>
    %cst_16 = arith.constant dense<0.000000e+00> : vector<2x256xf32>
    %26 = tpu.matmul %1, %25, %cst_16 {dimension_numbers = #tpu.dot_dimension_numbers<[1], [0], [0], [1], [0, 0, 1, 1], [], []>, precision = #tpu.contract_precision<fp32>} : vector<2x40xf32>, vector<40x256xf32>, vector<2x256xf32> -> vector<2x256xf32>
    %27 = arith.addf %24, %26 : vector<2x256xf32>
    %c0_17 = arith.constant 0 : index
    %c0_18 = arith.constant 0 : index
    %28 = vector.load %arg8[%c0_17, %c0_18] : memref<2x256xf32, #tpu.memory_space<vmem>>, vector<2x256xf32>
    tpu.vector_store %arg8[%c0_17, %c0_18], %27 {strides = array<i32>} : memref<2x256xf32, #tpu.memory_space<vmem>>, vector<2x256xf32>,
    %c0_19 = arith.constant 0 : index
    %c0_20 = arith.constant 0 : index
    %29 = vector.load %arg9[%c0_19, %c0_20] : memref<2x256xf32, #tpu.memory_space<vmem>>, vector<2x256xf32>
    tpu.vector_store %arg9[%c0_19, %c0_20], %24 {strides = array<i32>} : memref<2x256xf32, #tpu.memory_space<vmem>>, vector<2x256xf32>,
    %c0_21 = arith.constant 0 : index
    %c0_22 = arith.constant 0 : index
    %30 = vector.load %arg10[%c0_21, %c0_22] : memref<2x128xf32, #tpu.memory_space<vmem>>, vector<2x128xf32>
    tpu.vector_store %arg10[%c0_21, %c0_22], %22 {strides = array<i32>} : memref<2x128xf32, #tpu.memory_space<vmem>>, vector<2x128xf32>,
    return
  }
  func.func @transform_0(%arg0: i32) -> i32 {
    %c0_i32 = arith.constant 0 : i32
    %c0_i32_0 = arith.constant 0 : i32
    return %c0_i32 : i32
  }
  func.func @transform_1(%arg0: i32) -> (i32, i32) {
    %c0_i32 = arith.constant 0 : i32
    %c0_i32_0 = arith.constant 0 : i32
    return %arg0, %c0_i32 : i32, i32
  }
  func.func @transform_2(%arg0: i32) -> (i32, i32) {
    %c0_i32 = arith.constant 0 : i32
    %c0_i32_0 = arith.constant 0 : i32
    %c0_i32_1 = arith.constant 0 : i32
    return %c0_i32, %c0_i32_0 : i32, i32
  }
  func.func @transform_3(%arg0: i32) -> (i32, i32) {
    %c0_i32 = arith.constant 0 : i32
    %c0_i32_0 = arith.constant 0 : i32
    %c0_i32_1 = arith.constant 0 : i32
    return %c0_i32, %c0_i32_0 : i32, i32
  }
  func.func @transform_4(%arg0: i32) -> (i32, i32) {
    %c0_i32 = arith.constant 0 : i32
    %c0_i32_0 = arith.constant 0 : i32
    %c0_i32_1 = arith.constant 0 : i32
    return %c0_i32, %c0_i32_0 : i32, i32
  }
  func.func @transform_5(%arg0: i32) -> (i32, i32) {
    %c0_i32 = arith.constant 0 : i32
    %c0_i32_0 = arith.constant 0 : i32
    %c0_i32_1 = arith.constant 0 : i32
    return %c0_i32, %c0_i32_0 : i32, i32
  }
  func.func @transform_6(%arg0: i32) -> (i32, i32) {
    %c0_i32 = arith.constant 0 : i32
    %c0_i32_0 = arith.constant 0 : i32
    %c0_i32_1 = arith.constant 0 : i32
    return %c0_i32, %c0_i32_0 : i32, i32
  }
  func.func @transform_7(%arg0: i32) -> (i32, i32) {
    %c0_i32 = arith.constant 0 : i32
    %c0_i32_0 = arith.constant 0 : i32
    return %arg0, %c0_i32 : i32, i32
  }
  func.func @transform_8(%arg0: i32) -> (i32, i32) {
    %c0_i32 = arith.constant 0 : i32
    %c0_i32_0 = arith.constant 0 : i32
    return %arg0, %c0_i32 : i32, i32
  }
  func.func @transform_9(%arg0: i32) -> (i32, i32) {
    %c0_i32 = arith.constant 0 : i32
    %c0_i32_0 = arith.constant 0 : i32
    return %arg0, %c0_i32 : i32, i32
  }
}

</mosaic_0001>

<llo_original>
// kernel: tpu_custom_call.1
$region0: #{tpu_custom_call.1}
  #allocation0 [shape = 'u32[]', space=smem, size = 0x4, offset = 0x4, fixed_abs, tag = 'smem constant byte address 0x4 - core index']
  #allocation1 [shape = 'u32[144,128]{1,0:T(1,128)}', space=vmem, size = 0x12000, scoped, tag = 'internal scratch']
  #allocation2 [shape = 'f32[1]{0:T(128)S(6)}', space=smem, size = 0x200, scoped, tag = 'scoped memory for tpu_custom_call.1']
  %s0 = inlined_call_operand.<no memory space> [shape: f32[1], index: 0, kind: input, shape index: {}]
  %s1 = inlined_call_operand.vmem [shape: f32[2,40], index: 1, kind: input, shape index: {}]
  %s2 = inlined_call_operand.hbm [shape: f32[2,128], index: 2, kind: input, shape index: {}]
  %s3 = inlined_call_operand.hbm [shape: f32[40,128], index: 3, kind: input, shape index: {}]
  %s4 = inlined_call_operand.hbm [shape: f32[128,128], index: 4, kind: input, shape index: {}]
  %s5 = inlined_call_operand.hbm [shape: f32[128,256], index: 5, kind: input, shape index: {}]
  %s6 = inlined_call_operand.hbm [shape: f32[40,256], index: 6, kind: input, shape index: {}]
  %s7 = inlined_call_operand.hbm [shape: f32[2,256], index: 7, kind: output, shape index: {0}]
  %s8 = inlined_call_operand.hbm [shape: f32[2,256], index: 8, kind: output, shape index: {1}]
  %s9 = inlined_call_operand.hbm [shape: f32[2,128], index: 9, kind: output, shape index: {2}]
  %10 = xla_tuple %s7, %s8, %s9
  %s11 = sld [smem:[#allocation0]]
  $region74: #{tpu_custom_call.1} parent=0
    _
  %s13 = ssub.s32 1, %s11
  %s14 = scalar_select 0, %s13, %s11
  %15 = sst [smem:[#allocation2]] %s0
  $region1: #{tpu_custom_call.1} parent=0
    #allocation3 [shape = 'u8[1024]{0}', space=vmem, size = 0x400, scoped, tag = 'input window, operand 2, single buffered']
    #allocation4 [shape = 's32[1]{0}', space=sflag, size = 0x4, scoped, tag = 'scoped memory for tpu_custom_call.1']
    #allocation5 [shape = 's32[1]{0}', space=sflag, size = 0x4, scoped, tag = 'scoped memory for tpu_custom_call.1']
    #allocation6 [shape = 'u8[20480]{0}', space=vmem, size = 0x5000, scoped, tag = 'input window, operand 3, single buffered']
    #allocation7 [shape = 's32[1]{0}', space=sflag, size = 0x4, scoped, tag = 'scoped memory for tpu_custom_call.1']
    #allocation8 [shape = 'u8[65536]{0}', space=vmem, size = 0x10000, scoped, tag = 'input window, operand 4, single buffered']
    #allocation9 [shape = 'u8[131072]{0}', space=vmem, size = 0x20000, scoped, tag = 'input window, operand 5, single buffered']
    #allocation10 [shape = 's32[1]{0}', space=sflag, size = 0x4, scoped, tag = 'scoped memory for tpu_custom_call.1']
    #allocation11 [shape = 'u8[40960]{0}', space=vmem, size = 0xa000, scoped, tag = 'input window, operand 6, single buffered']
    #allocation12 [shape = 'u8[2048]{0}', space=vmem, size = 0x800, scoped, tag = 'output window, operand 0, single buffered']
    #allocation13 [shape = 'u8[2048]{0}', space=vmem, size = 0x800, scoped, tag = 'output window, operand 1, single buffered']
    #allocation14 [shape = 's32[1]{0}', space=sflag, size = 0x4, scoped, tag = 'scoped memory for tpu_custom_call.1']
    #allocation15 [shape = 'u8[1024]{0}', space=vmem, size = 0x400, scoped, tag = 'output window, operand 2, single buffered']
    %16 = vsyncpa [#allocation4], 0
    %17 = vsyncpa [#allocation7], 0
    %18 = vsyncpa [#allocation10], 0
    %19 = vsyncpa [#allocation5], 0
    %20 = vsyncpa [#allocation14], 0
    // Predicated region
    $region2: #{tpu_custom_call.1} parent=1 // pred_check
      _
    $region3: #{tpu_custom_call.1} parent=1 // pred_check_branch
      %22 = sbr.rel (0) target = $region5
    $region4: #{tpu_custom_call.1} parent=1 // pred_region
      _
    $region5: #{tpu_custom_call.1} parent=1 // pred_fallthru
      _
    // Predicated region
    $region6: #{tpu_custom_call.1} parent=1 // pred_check
      _
    $region7: #{tpu_custom_call.1} parent=1 // pred_check_branch
      %24 = sbr.rel (0) target = $region9
    $region8: #{tpu_custom_call.1} parent=1 // pred_region
      _
    $region9: #{tpu_custom_call.1} parent=1 // pred_fallthru
      _
    // Predicated region
    $region10: #{tpu_custom_call.1} parent=1 // pred_check
      _
    $region11: #{tpu_custom_call.1} parent=1 // pred_check_branch
      %26 = sbr.rel (0) target = $region13
    $region12: #{tpu_custom_call.1} parent=1 // pred_region
      %s28 = ssub.s32 32, 32
      %29 = vsyncadd [#allocation4], %s28
      %s31 = sshll.u32 [#allocation3], 4
      %s32 = int_to_ptr.vmem [resolvable:$true] %s31
      %34 = dma.hbm_to_vmem [thread:$0]  %s2, 32, %s32, [#allocation4]
    $region13: #{tpu_custom_call.1} parent=1 // pred_fallthru
      _
    // Predicated region
    $region14: #{tpu_custom_call.1} parent=1 // pred_check
      _
    $region15: #{tpu_custom_call.1} parent=1 // pred_check_branch
      %36 = sbr.rel (0) target = $region17
    $region16: #{tpu_custom_call.1} parent=1 // pred_region
      %s38 = ssub.s32 640, 640
      %39 = vsyncadd [#allocation7], %s38
      %s40 = sshll.u32 [#allocation6], 4
      %s41 = int_to_ptr.vmem [resolvable:$true] %s40
      %46 = dma.hbm_to_vmem [thread:$0]  %s3, 640, %s41, [#allocation7], 128, 128, 8
    $region17: #{tpu_custom_call.1} parent=1 // pred_fallthru
      _
    // Predicated region
    $region18: #{tpu_custom_call.1} parent=1 // pred_check
      _
    $region19: #{tpu_custom_call.1} parent=1 // pred_check_branch
      %48 = sbr.rel (0) target = $region21
    $region20: #{tpu_custom_call.1} parent=1 // pred_region
      %s50 = ssub.s32 2048, 2048
      %51 = vsyncadd [#allocation7], %s50
      %s52 = sshll.u32 [#allocation8], 4
      %s53 = int_to_ptr.vmem [resolvable:$true] %s52
      %58 = dma.hbm_to_vmem [thread:$0]  %s4, 2048, %s53, [#allocation7], 128, 128, 8
    $region21: #{tpu_custom_call.1} parent=1 // pred_fallthru
      _
    // Predicated region
    $region22: #{tpu_custom_call.1} parent=1 // pred_check
      _
    $region23: #{tpu_custom_call.1} parent=1 // pred_check_branch
      %60 = sbr.rel (0) target = $region25
    $region24: #{tpu_custom_call.1} parent=1 // pred_region
      %s62 = ssub.s32 4096, 4096
      %63 = vsyncadd [#allocation10], %s62
      %s64 = sshll.u32 [#allocation9], 4
      %s65 = int_to_ptr.vmem [resolvable:$true] %s64
      %70 = dma.hbm_to_vmem [thread:$0]  %s5, 4096, %s65, [#allocation10], 256, 256, 16
    $region25: #{tpu_custom_call.1} parent=1 // pred_fallthru
      _
    // Predicated region
    $region26: #{tpu_custom_call.1} parent=1 // pred_check
      _
    $region27: #{tpu_custom_call.1} parent=1 // pred_check_branch
      %72 = sbr.rel (0) target = $region29
    $region28: #{tpu_custom_call.1} parent=1 // pred_region
      %s74 = ssub.s32 1280, 1280
      %75 = vsyncadd [#allocation10], %s74
      %s76 = sshll.u32 [#allocation11], 4
      %s77 = int_to_ptr.vmem [resolvable:$true] %s76
      %82 = dma.hbm_to_vmem [thread:$0]  %s6, 1280, %s77, [#allocation10], 256, 256, 16
    $region29: #{tpu_custom_call.1} parent=1 // pred_fallthru
      _
    // Predicated region
    $region30: #{tpu_custom_call.1} parent=1 // pred_check
      _
    $region31: #{tpu_custom_call.1} parent=1 // pred_check_branch
      %84 = sbr.rel (0) target = $region33
    $region32: #{tpu_custom_call.1} parent=1 // pred_region
      %85 = dma.done [#allocation4], 32
    $region33: #{tpu_custom_call.1} parent=1 // pred_fallthru
      _
    // Predicated region
    $region34: #{tpu_custom_call.1} parent=1 // pred_check
      _
    $region35: #{tpu_custom_call.1} parent=1 // pred_check_branch
      %87 = sbr.rel (0) target = $region37
    $region36: #{tpu_custom_call.1} parent=1 // pred_region
      %88 = dma.done [#allocation7], 640
    $region37: #{tpu_custom_call.1} parent=1 // pred_fallthru
      _
    // Predicated region
    $region38: #{tpu_custom_call.1} parent=1 // pred_check
      _
    $region39: #{tpu_custom_call.1} parent=1 // pred_check_branch
      %90 = sbr.rel (0) target = $region41
    $region40: #{tpu_custom_call.1} parent=1 // pred_region
      %91 = dma.done [#allocation7], 2048
    $region41: #{tpu_custom_call.1} parent=1 // pred_fallthru
      _
    // Predicated region
    $region42: #{tpu_custom_call.1} parent=1 // pred_check
      _
    $region43: #{tpu_custom_call.1} parent=1 // pred_check_branch
      %93 = sbr.rel (0) target = $region45
    $region44: #{tpu_custom_call.1} parent=1 // pred_region
      %94 = dma.done [#allocation10], 4096
    $region45: #{tpu_custom_call.1} parent=1 // pred_fallthru
      _
    // Predicated region
    $region46: #{tpu_custom_call.1} parent=1 // pred_check
      _
    $region47: #{tpu_custom_call.1} parent=1 // pred_check_branch
      %96 = sbr.rel (0) target = $region49
    $region48: #{tpu_custom_call.1} parent=1 // pred_region
      %97 = dma.done [#allocation10], 1280
    $region49: #{tpu_custom_call.1} parent=1 // pred_fallthru
      _
    %s98 = sld [smem:[#allocation2]]
    %v99 = vld [vmem:[%s1] sm:$0x3]
    %v100 = vld [vmem:[#allocation6] sm:$0xff]
    %v101 = vld [vmem:[#allocation6 + $0x8] sm:$0xff]
    %v102 = vld [vmem:[#allocation6 + $0x10] sm:$0xff]
    %v103 = vld [vmem:[#allocation6 + $0x18] sm:$0xff]
    %v104 = vld [vmem:[#allocation6 + $0x20] sm:$0xff]
    %vm105 = vcmask 326656
    %v107 = vsel %vm105, %v99, 0
    %109 = vmatprep.subr.mxu0 0.0
    %110 = vmatpush1.msra.mxu0 0.0
    %111 = vmatprep.subr.mxu0 0.0
    %112 = vmatpush1.msra.mxu0 0.0
    %113 = vmatprep.subr.mxu0 0.0
    %114 = vmatpush1.msra.mxu0 0.0
    %115 = vmatprep.subr.mxu0 0.0
    %116 = vmatpush1.msra.mxu0 0.0
    %117 = vmatprep.subr.mxu0 0.0
    %118 = vmatpush1.msra.mxu0 0.0
    %119 = vmatprep.subr.mxu0 0.0
    %120 = vmatpush1.msra.mxu0 0.0
    %121 = vmatprep.subr.mxu0 0.0
    %122 = vmatpush1.msra.mxu0 0.0
    %123 = vmatprep.subr.mxu0 0.0
    %124 = vmatpush1.msra.mxu0 0.0
    %125 = vmatprep.subr.mxu0 0.0
    %126 = vmatpush1.msra.mxu0 0.0
    %127 = vmatprep.subr.mxu0 0.0
    %128 = vmatpush1.msra.mxu0 0.0
    %129 = vmatprep.subr.mxu0 0.0
    %130 = vmatpush1.msra.mxu0 0.0
    %131 = vmatprep.subr.mxu0 0.0
    %v132 = vand.u32 %v104, 4294901760
    %133 = vmatpush1.msra.mxu0 %v132
    %134 = vmatprep.subr.mxu0 0.0
    %v135 = vand.u32 %v103, 4294901760
    %136 = vmatpush1.msra.mxu0 %v135
    %137 = vmatprep.subr.mxu0 0.0
    %v138 = vand.u32 %v102, 4294901760
    %139 = vmatpush1.msra.mxu0 %v138
    %140 = vmatprep.subr.mxu0 0.0
    %v141 = vand.u32 %v101, 4294901760
    %142 = vmatpush1.msra.mxu0 %v141
    %143 = vmatprep.subr.mxu0 0.0
    %v144 = vand.u32 %v100, 4294901760
    %145 = vmatpush1.msra.mxu0 %v144
    %146 = vmatprep.subr.mxu0 0.0
    %147 = vmatpush2.msra.mxu0 0.0
    %148 = vmatprep.subr.mxu0 0.0
    %149 = vmatpush2.msra.mxu0 0.0
    %150 = vmatprep.subr.mxu0 0.0
    %151 = vmatpush2.msra.mxu0 0.0
    %152 = vmatprep.subr.mxu0 0.0
    %153 = vmatpush2.msra.mxu0 0.0
    %154 = vmatprep.subr.mxu0 0.0
    %155 = vmatpush2.msra.mxu0 0.0
    %156 = vmatprep.subr.mxu0 0.0
    %157 = vmatpush2.msra.mxu0 0.0
    %158 = vmatprep.subr.mxu0 0.0
    %159 = vmatpush2.msra.mxu0 0.0
    %160 = vmatprep.subr.mxu0 0.0
    %161 = vmatpush2.msra.mxu0 0.0
    %162 = vmatprep.subr.mxu0 0.0
    %163 = vmatpush2.msra.mxu0 0.0
    %164 = vmatprep.subr.mxu0 0.0
    %165 = vmatpush2.msra.mxu0 0.0
    %166 = vmatprep.subr.mxu0 0.0
    %167 = vmatpush2.msra.mxu0 0.0
    %168 = vmatprep.subr.mxu0 0.0
    %169 = vmatpush2.msra.mxu0 0.0
    %170 = vmatprep.subr.mxu0 0.0
    %171 = vmatpush2.msra.mxu0 0.0
    %172 = vmatprep.subr.mxu0 0.0
    %173 = vmatpush2.msra.mxu0 0.0
    %174 = vmatprep.subr.mxu0 0.0
    %175 = vmatpush2.msra.mxu0 0.0
    %176 = vmatprep.subr.mxu0 0.0
    %177 = vmatpush2.msra.mxu0 0.0
    %178 = vmatprep.mubr.f32.mxu0 0.0
    %v179 = vand.u32 %v107, 4294901760
    %v180 = vsub.f32 %v107, %v179
    %v181 = vand.u32 %v180, 4294901760
    %v182 = vsub.f32 %v180, %v181
    %v183 = vand.u32 %v182, 4294901760
    %184 = vmatmul.mubr.f32.gmra.mxu0 %v183
    %v185 = vpop.f32.mrf.mxu0
    %v186 = vadd.f32 0.0, %v185
    %v187 = vpop.f32.mrf.mxu0
    %188 = vdwg.mxu0
    %189 = vmatprep.subr.mxu0 0.0
    %190 = vmatpush1.msra.mxu0 0.0
    %191 = vmatprep.subr.mxu0 0.0
    %192 = vmatpush1.msra.mxu0 0.0
    %193 = vmatprep.subr.mxu0 0.0
    %194 = vmatpush1.msra.mxu0 0.0
    %195 = vmatprep.subr.mxu0 0.0
    %196 = vmatpush1.msra.mxu0 0.0
    %197 = vmatprep.subr.mxu0 0.0
    %198 = vmatpush1.msra.mxu0 0.0
    %199 = vmatprep.subr.mxu0 0.0
    %200 = vmatpush1.msra.mxu0 0.0
    %201 = vmatprep.subr.mxu0 0.0
    %202 = vmatpush1.msra.mxu0 0.0
    %203 = vmatprep.subr.mxu0 0.0
    %204 = vmatpush1.msra.mxu0 0.0
    %205 = vmatprep.subr.mxu0 0.0
    %206 = vmatpush1.msra.mxu0 0.0
    %207 = vmatprep.subr.mxu0 0.0
    %208 = vmatpush1.msra.mxu0 0.0
    %209 = vmatprep.subr.mxu0 0.0
    %210 = vmatpush1.msra.mxu0 0.0
    %211 = vmatprep.subr.mxu0 0.0
    %v212 = vand.u32 %v104, 4294901760
    %v213 = vsub.f32 %v104, %v212
    %v214 = vand.u32 %v213, 4294901760
    %v215 = vsub.f32 %v213, %v214
    %v216 = vand.u32 %v215, 4294901760
    %217 = vmatpush1.msra.mxu0 %v216
    %218 = vmatprep.subr.mxu0 0.0
    %v219 = vand.u32 %v103, 4294901760
    %v220 = vsub.f32 %v103, %v219
    %v221 = vand.u32 %v220, 4294901760
    %v222 = vsub.f32 %v220, %v221
    %v223 = vand.u32 %v222, 4294901760
    %224 = vmatpush1.msra.mxu0 %v223
    %225 = vmatprep.subr.mxu0 0.0
    %v226 = vand.u32 %v102, 4294901760
    %v227 = vsub.f32 %v102, %v226
    %v228 = vand.u32 %v227, 4294901760
    %v229 = vsub.f32 %v227, %v228
    %v230 = vand.u32 %v229, 4294901760
    %231 = vmatpush1.msra.mxu0 %v230
    %232 = vmatprep.subr.mxu0 0.0
    %v233 = vand.u32 %v101, 4294901760
    %v234 = vsub.f32 %v101, %v233
    %v235 = vand.u32 %v234, 4294901760
    %v236 = vsub.f32 %v234, %v235
    %v237 = vand.u32 %v236, 4294901760
    %238 = vmatpush1.msra.mxu0 %v237
    %239 = vmatprep.subr.mxu0 0.0
    %v240 = vand.u32 %v100, 4294901760
    %v241 = vsub.f32 %v100, %v240
    %v242 = vand.u32 %v241, 4294901760
    %v243 = vsub.f32 %v241, %v242
    %v244 = vand.u32 %v243, 4294901760
    %245 = vmatpush1.msra.mxu0 %v244
    %246 = vmatprep.subr.mxu0 0.0
    %247 = vmatpush2.msra.mxu0 0.0
    %248 = vmatprep.subr.mxu0 0.0
    %249 = vmatpush2.msra.mxu0 0.0
    %250 = vmatprep.subr.mxu0 0.0
    %251 = vmatpush2.msra.mxu0 0.0
    %252 = vmatprep.subr.mxu0 0.0
    %253 = vmatpush2.msra.mxu0 0.0
    %254 = vmatprep.subr.mxu0 0.0
    %255 = vmatpush2.msra.mxu0 0.0
    %256 = vmatprep.subr.mxu0 0.0
    %257 = vmatpush2.msra.mxu0 0.0
    %258 = vmatprep.subr.mxu0 0.0
    %259 = vmatpush2.msra.mxu0 0.0
    %260 = vmatprep.subr.mxu0 0.0
    %261 = vmatpush2.msra.mxu0 0.0
    %262 = vmatprep.subr.mxu0 0.0
    %263 = vmatpush2.msra.mxu0 0.0
    %264 = vmatprep.subr.mxu0 0.0
    %265 = vmatpush2.msra.mxu0 0.0
    %266 = vmatprep.subr.mxu0 0.0
    %267 = vmatpush2.msra.mxu0 0.0
    %268 = vmatprep.subr.mxu0 0.0
    %269 = vmatpush2.msra.mxu0 0.0
    %270 = vmatprep.subr.mxu0 0.0
    %271 = vmatpush2.msra.mxu0 0.0
    %272 = vmatprep.subr.mxu0 0.0
    %273 = vmatpush2.msra.mxu0 0.0
    %274 = vmatprep.subr.mxu0 0.0
    %275 = vmatpush2.msra.mxu0 0.0
    %276 = vmatprep.subr.mxu0 0.0
    %277 = vmatpush2.msra.mxu0 0.0
    %278 = vmatprep.mubr.f32.mxu0 0.0
    %v279 = vand.u32 %v107, 4294901760
    %280 = vmatmul.mubr.f32.gmra.mxu0 %v279
    %v281 = vpop.f32.mrf.mxu0
    %v282 = vadd.f32 %v186, %v281
    %v283 = vpop.f32.mrf.mxu0
    %284 = vdwg.mxu0
    %285 = vmatprep.subr.mxu0 0.0
    %286 = vmatpush1.msra.mxu0 0.0
    %287 = vmatprep.subr.mxu0 0.0
    %288 = vmatpush1.msra.mxu0 0.0
    %289 = vmatprep.subr.mxu0 0.0
    %290 = vmatpush1.msra.mxu0 0.0
    %291 = vmatprep.subr.mxu0 0.0
    %292 = vmatpush1.msra.mxu0 0.0
    %293 = vmatprep.subr.mxu0 0.0
    %294 = vmatpush1.msra.mxu0 0.0
    %295 = vmatprep.subr.mxu0 0.0
    %296 = vmatpush1.msra.mxu0 0.0
    %297 = vmatprep.subr.mxu0 0.0
    %298 = vmatpush1.msra.mxu0 0.0
    %299 = vmatprep.subr.mxu0 0.0
    %300 = vmatpush1.msra.mxu0 0.0
    %301 = vmatprep.subr.mxu0 0.0
    %302 = vmatpush1.msra.mxu0 0.0
    %303 = vmatprep.subr.mxu0 0.0
    %304 = vmatpush1.msra.mxu0 0.0
    %305 = vmatprep.subr.mxu0 0.0
    %306 = vmatpush1.msra.mxu0 0.0
    %307 = vmatprep.subr.mxu0 0.0
    %v308 = vand.u32 %v104, 4294901760
    %v309 = vsub.f32 %v104, %v308
    %310 = vmatpush1.msra.mxu0 %v309
    %311 = vmatprep.subr.mxu0 0.0
    %v312 = vand.u32 %v103, 4294901760
    %v313 = vsub.f32 %v103, %v312
    %314 = vmatpush1.msra.mxu0 %v313
    %315 = vmatprep.subr.mxu0 0.0
    %v316 = vand.u32 %v102, 4294901760
    %v317 = vsub.f32 %v102, %v316
    %318 = vmatpush1.msra.mxu0 %v317
    %319 = vmatprep.subr.mxu0 0.0
    %v320 = vand.u32 %v101, 4294901760
    %v321 = vsub.f32 %v101, %v320
    %322 = vmatpush1.msra.mxu0 %v321
    %323 = vmatprep.subr.mxu0 0.0
    %v324 = vand.u32 %v100, 4294901760
    %v325 = vsub.f32 %v100, %v324
    %326 = vmatpush1.msra.mxu0 %v325
    %327 = vmatprep.subr.mxu0 0.0
    %328 = vmatpush2.msra.mxu0 0.0
    %329 = vmatprep.subr.mxu0 0.0
    %330 = vmatpush2.msra.mxu0 0.0
    %331 = vmatprep.subr.mxu0 0.0
    %332 = vmatpush2.msra.mxu0 0.0
    %333 = vmatprep.subr.mxu0 0.0
    %334 = vmatpush2.msra.mxu0 0.0
    %335 = vmatprep.subr.mxu0 0.0
    %336 = vmatpush2.msra.mxu0 0.0
    %337 = vmatprep.subr.mxu0 0.0
    %338 = vmatpush2.msra.mxu0 0.0
    %339 = vmatprep.subr.mxu0 0.0
    %340 = vmatpush2.msra.mxu0 0.0
    %341 = vmatprep.subr.mxu0 0.0
    %342 = vmatpush2.msra.mxu0 0.0
    %343 = vmatprep.subr.mxu0 0.0
    %344 = vmatpush2.msra.mxu0 0.0
    %345 = vmatprep.subr.mxu0 0.0
    %346 = vmatpush2.msra.mxu0 0.0
    %347 = vmatprep.subr.mxu0 0.0
    %348 = vmatpush2.msra.mxu0 0.0
    %349 = vmatprep.subr.mxu0 0.0
    %350 = vmatpush2.msra.mxu0 0.0
    %351 = vmatprep.subr.mxu0 0.0
    %352 = vmatpush2.msra.mxu0 0.0
    %353 = vmatprep.subr.mxu0 0.0
    %354 = vmatpush2.msra.mxu0 0.0
    %355 = vmatprep.subr.mxu0 0.0
    %356 = vmatpush2.msra.mxu0 0.0
    %357 = vmatprep.subr.mxu0 0.0
    %358 = vmatpush2.msra.mxu0 0.0
    %359 = vmatprep.mubr.f32.mxu0 0.0
    %v360 = vand.u32 %v107, 4294901760
    %v361 = vsub.f32 %v107, %v360
    %362 = vmatmul.mubr.f32.gmra.mxu0 %v361
    %v363 = vpop.f32.mrf.mxu0
    %v364 = vadd.f32 %v282, %v363
    %v365 = vpop.f32.mrf.mxu0
    %366 = vdwg.mxu0
    %367 = vmatprep.subr.mxu0 0.0
    %368 = vmatpush1.msra.mxu0 0.0
    %369 = vmatprep.subr.mxu0 0.0
    %370 = vmatpush1.msra.mxu0 0.0
    %371 = vmatprep.subr.mxu0 0.0
    %372 = vmatpush1.msra.mxu0 0.0
    %373 = vmatprep.subr.mxu0 0.0
    %374 = vmatpush1.msra.mxu0 0.0
    %375 = vmatprep.subr.mxu0 0.0
    %376 = vmatpush1.msra.mxu0 0.0
    %377 = vmatprep.subr.mxu0 0.0
    %378 = vmatpush1.msra.mxu0 0.0
    %379 = vmatprep.subr.mxu0 0.0
    %380 = vmatpush1.msra.mxu0 0.0
    %381 = vmatprep.subr.mxu0 0.0
    %382 = vmatpush1.msra.mxu0 0.0
    %383 = vmatprep.subr.mxu0 0.0
    %384 = vmatpush1.msra.mxu0 0.0
    %385 = vmatprep.subr.mxu0 0.0
    %386 = vmatpush1.msra.mxu0 0.0
    %387 = vmatprep.subr.mxu0 0.0
    %388 = vmatpush1.msra.mxu0 0.0
    %389 = vmatprep.subr.mxu0 0.0
    %v390 = vand.u32 %v104, 4294901760
    %391 = vmatpush1.msra.mxu0 %v390
    %392 = vmatprep.subr.mxu0 0.0
    %v393 = vand.u32 %v103, 4294901760
    %394 = vmatpush1.msra.mxu0 %v393
    %395 = vmatprep.subr.mxu0 0.0
    %v396 = vand.u32 %v102, 4294901760
    %397 = vmatpush1.msra.mxu0 %v396
    %398 = vmatprep.subr.mxu0 0.0
    %v399 = vand.u32 %v101, 4294901760
    %400 = vmatpush1.msra.mxu0 %v399
    %401 = vmatprep.subr.mxu0 0.0
    %v402 = vand.u32 %v100, 4294901760
    %403 = vmatpush1.msra.mxu0 %v402
    %404 = vmatprep.subr.mxu0 0.0
    %405 = vmatpush2.msra.mxu0 0.0
    %406 = vmatprep.subr.mxu0 0.0
    %407 = vmatpush2.msra.mxu0 0.0
    %408 = vmatprep.subr.mxu0 0.0
    %409 = vmatpush2.msra.mxu0 0.0
    %410 = vmatprep.subr.mxu0 0.0
    %411 = vmatpush2.msra.mxu0 0.0
    %412 = vmatprep.subr.mxu0 0.0
    %413 = vmatpush2.msra.mxu0 0.0
    %414 = vmatprep.subr.mxu0 0.0
    %415 = vmatpush2.msra.mxu0 0.0
    %416 = vmatprep.subr.mxu0 0.0
    %417 = vmatpush2.msra.mxu0 0.0
    %418 = vmatprep.subr.mxu0 0.0
    %419 = vmatpush2.msra.mxu0 0.0
    %420 = vmatprep.subr.mxu0 0.0
    %421 = vmatpush2.msra.mxu0 0.0
    %422 = vmatprep.subr.mxu0 0.0
    %423 = vmatpush2.msra.mxu0 0.0
    %424 = vmatprep.subr.mxu0 0.0
    %425 = vmatpush2.msra.mxu0 0.0
    %426 = vmatprep.subr.mxu0 0.0
    %427 = vmatpush2.msra.mxu0 0.0
    %428 = vmatprep.subr.mxu0 0.0
    %429 = vmatpush2.msra.mxu0 0.0
    %430 = vmatprep.subr.mxu0 0.0
    %431 = vmatpush2.msra.mxu0 0.0
    %432 = vmatprep.subr.mxu0 0.0
    %433 = vmatpush2.msra.mxu0 0.0
    %434 = vmatprep.subr.mxu0 0.0
    %435 = vmatpush2.msra.mxu0 0.0
    %436 = vmatprep.mubr.f32.mxu0 0.0
    %v437 = vand.u32 %v107, 4294901760
    %v438 = vsub.f32 %v107, %v437
    %v439 = vand.u32 %v438, 4294901760
    %440 = vmatmul.mubr.f32.gmra.mxu0 %v439
    %v441 = vpop.f32.mrf.mxu0
    %v442 = vadd.f32 %v364, %v441
    %v443 = vpop.f32.mrf.mxu0
    %444 = vdwg.mxu0
    %445 = vmatprep.subr.mxu0 0.0
    %446 = vmatpush1.msra.mxu0 0.0
    %447 = vmatprep.subr.mxu0 0.0
    %448 = vmatpush1.msra.mxu0 0.0
    %449 = vmatprep.subr.mxu0 0.0
    %450 = vmatpush1.msra.mxu0 0.0
    %451 = vmatprep.subr.mxu0 0.0
    %452 = vmatpush1.msra.mxu0 0.0
    %453 = vmatprep.subr.mxu0 0.0
    %454 = vmatpush1.msra.mxu0 0.0
    %455 = vmatprep.subr.mxu0 0.0
    %456 = vmatpush1.msra.mxu0 0.0
    %457 = vmatprep.subr.mxu0 0.0
    %458 = vmatpush1.msra.mxu0 0.0
    %459 = vmatprep.subr.mxu0 0.0
    %460 = vmatpush1.msra.mxu0 0.0
    %461 = vmatprep.subr.mxu0 0.0
    %462 = vmatpush1.msra.mxu0 0.0
    %463 = vmatprep.subr.mxu0 0.0
    %464 = vmatpush1.msra.mxu0 0.0
    %465 = vmatprep.subr.mxu0 0.0
    %466 = vmatpush1.msra.mxu0 0.0
    %467 = vmatprep.subr.mxu0 0.0
    %v468 = vand.u32 %v104, 4294901760
    %v469 = vsub.f32 %v104, %v468
    %v470 = vand.u32 %v469, 4294901760
    %471 = vmatpush1.msra.mxu0 %v470
    %472 = vmatprep.subr.mxu0 0.0
    %v473 = vand.u32 %v103, 4294901760
    %v474 = vsub.f32 %v103, %v473
    %v475 = vand.u32 %v474, 4294901760
    %476 = vmatpush1.msra.mxu0 %v475
    %477 = vmatprep.subr.mxu0 0.0
    %v478 = vand.u32 %v102, 4294901760
    %v479 = vsub.f32 %v102, %v478
    %v480 = vand.u32 %v479, 4294901760
    %481 = vmatpush1.msra.mxu0 %v480
    %482 = vmatprep.subr.mxu0 0.0
    %v483 = vand.u32 %v101, 4294901760
    %v484 = vsub.f32 %v101, %v483
    %v485 = vand.u32 %v484, 4294901760
    %486 = vmatpush1.msra.mxu0 %v485
    %487 = vmatprep.subr.mxu0 0.0
    %v488 = vand.u32 %v100, 4294901760
    %v489 = vsub.f32 %v100, %v488
    %v490 = vand.u32 %v489, 4294901760
    %491 = vmatpush1.msra.mxu0 %v490
    %492 = vmatprep.subr.mxu0 0.0
    %493 = vmatpush2.msra.mxu0 0.0
    %494 = vmatprep.subr.mxu0 0.0
    %495 = vmatpush2.msra.mxu0 0.0
    %496 = vmatprep.subr.mxu0 0.0
    %497 = vmatpush2.msra.mxu0 0.0
    %498 = vmatprep.subr.mxu0 0.0
    %499 = vmatpush2.msra.mxu0 0.0
    %500 = vmatprep.subr.mxu0 0.0
    %501 = vmatpush2.msra.mxu0 0.0
    %502 = vmatprep.subr.mxu0 0.0
    %503 = vmatpush2.msra.mxu0 0.0
    %504 = vmatprep.subr.mxu0 0.0
    %505 = vmatpush2.msra.mxu0 0.0
    %506 = vmatprep.subr.mxu0 0.0
    %507 = vmatpush2.msra.mxu0 0.0
    %508 = vmatprep.subr.mxu0 0.0
    %509 = vmatpush2.msra.mxu0 0.0
    %510 = vmatprep.subr.mxu0 0.0
    %511 = vmatpush2.msra.mxu0 0.0
    %512 = vmatprep.subr.mxu0 0.0
    %513 = vmatpush2.msra.mxu0 0.0
    %514 = vmatprep.subr.mxu0 0.0
    %515 = vmatpush2.msra.mxu0 0.0
    %516 = vmatprep.subr.mxu0 0.0
    %517 = vmatpush2.msra.mxu0 0.0
    %518 = vmatprep.subr.mxu0 0.0
    %519 = vmatpush2.msra.mxu0 0.0
    %520 = vmatprep.subr.mxu0 0.0
    %521 = vmatpush2.msra.mxu0 0.0
    %522 = vmatprep.subr.mxu0 0.0
    %523 = vmatpush2.msra.mxu0 0.0
    %524 = vmatprep.mubr.f32.mxu0 0.0
    %v525 = vand.u32 %v107, 4294901760
    %526 = vmatmul.mubr.f32.gmra.mxu0 %v525
    %v527 = vpop.f32.mrf.mxu0
    %v528 = vadd.f32 %v442, %v527
    %v529 = vpop.f32.mrf.mxu0
    %530 = vdwg.mxu0
    %531 = vmatprep.subr.mxu0 0.0
    %532 = vmatpush1.msra.mxu0 0.0
    %533 = vmatprep.subr.mxu0 0.0
    %534 = vmatpush1.msra.mxu0 0.0
    %535 = vmatprep.subr.mxu0 0.0
    %536 = vmatpush1.msra.mxu0 0.0
    %537 = vmatprep.subr.mxu0 0.0
    %538 = vmatpush1.msra.mxu0 0.0
    %539 = vmatprep.subr.mxu0 0.0
    %540 = vmatpush1.msra.mxu0 0.0
    %541 = vmatprep.subr.mxu0 0.0
    %542 = vmatpush1.msra.mxu0 0.0
    %543 = vmatprep.subr.mxu0 0.0
    %544 = vmatpush1.msra.mxu0 0.0
    %545 = vmatprep.subr.mxu0 0.0
    %546 = vmatpush1.msra.mxu0 0.0
    %547 = vmatprep.subr.mxu0 0.0
    %548 = vmatpush1.msra.mxu0 0.0
    %549 = vmatprep.subr.mxu0 0.0
    %550 = vmatpush1.msra.mxu0 0.0
    %551 = vmatprep.subr.mxu0 0.0
    %552 = vmatpush1.msra.mxu0 0.0
    %553 = vmatprep.subr.mxu0 0.0
    %v554 = vand.u32 %v104, 4294901760
    %555 = vmatpush1.msra.mxu0 %v554
    %556 = vmatprep.subr.mxu0 0.0
    %v557 = vand.u32 %v103, 4294901760
    %558 = vmatpush1.msra.mxu0 %v557
    %559 = vmatprep.subr.mxu0 0.0
    %v560 = vand.u32 %v102, 4294901760
    %561 = vmatpush1.msra.mxu0 %v560
    %562 = vmatprep.subr.mxu0 0.0
    %v563 = vand.u32 %v101, 4294901760
    %564 = vmatpush1.msra.mxu0 %v563
    %565 = vmatprep.subr.mxu0 0.0
    %v566 = vand.u32 %v100, 4294901760
    %567 = vmatpush1.msra.mxu0 %v566
    %568 = vmatprep.subr.mxu0 0.0
    %569 = vmatpush2.msra.mxu0 0.0
    %570 = vmatprep.subr.mxu0 0.0
    %571 = vmatpush2.msra.mxu0 0.0
    %572 = vmatprep.subr.mxu0 0.0
    %573 = vmatpush2.msra.mxu0 0.0
    %574 = vmatprep.subr.mxu0 0.0
    %575 = vmatpush2.msra.mxu0 0.0
    %576 = vmatprep.subr.mxu0 0.0
    %577 = vmatpush2.msra.mxu0 0.0
    %578 = vmatprep.subr.mxu0 0.0
    %579 = vmatpush2.msra.mxu0 0.0
    %580 = vmatprep.subr.mxu0 0.0
    %581 = vmatpush2.msra.mxu0 0.0
    %582 = vmatprep.subr.mxu0 0.0
    %583 = vmatpush2.msra.mxu0 0.0
    %584 = vmatprep.subr.mxu0 0.0
    %585 = vmatpush2.msra.mxu0 0.0
    %586 = vmatprep.subr.mxu0 0.0
    %587 = vmatpush2.msra.mxu0 0.0
    %588 = vmatprep.subr.mxu0 0.0
    %589 = vmatpush2.msra.mxu0 0.0
    %590 = vmatprep.subr.mxu0 0.0
    %591 = vmatpush2.msra.mxu0 0.0
    %592 = vmatprep.subr.mxu0 0.0
    %593 = vmatpush2.msra.mxu0 0.0
    %594 = vmatprep.subr.mxu0 0.0
    %595 = vmatpush2.msra.mxu0 0.0
    %596 = vmatprep.subr.mxu0 0.0
    %597 = vmatpush2.msra.mxu0 0.0
    %598 = vmatprep.subr.mxu0 0.0
    %599 = vmatpush2.msra.mxu0 0.0
    %600 = vmatprep.mubr.f32.mxu0 0.0
    %v601 = vand.u32 %v107, 4294901760
    %602 = vmatmul.mubr.f32.gmra.mxu0 %v601
    %v603 = vpop.f32.mrf.mxu0
    %v604 = vadd.f32 %v528, %v603
    %v605 = vpop.f32.mrf.mxu0
    %606 = vdwg.mxu0
    %v607 = vld [vmem:[#allocation3] sm:$0x3]
    %v608 = vlaneseq
    %v609 = vshrl.u32 %v608, 7
    %v610 = vsub.s32 0, %v609
    %v611 = vrot.slane %v607, %v610
    %v612 = vmul.f32 %v604, %v611
    %v613 = vlaneseq
    %v614 = vshrl.u32 %v613, 7
    %v615 = vsub.s32 1, %v614
    %v616 = vrot.slane %v607, %v615
    %v617 = vadd.f32 %v612, %v616
    %vm618 = vcmask 1041408
    %v619 = vsel %vm618, %v617, -inf
    %620 = vmax.xlane.f32.xlu0 %v619
    %v621 = vpop.xlane.xlu0 %620
    %v622 = vsub.f32 %v617, %v621
    %v623 = vmul.f32 %v622, 1.442695
    %v624 = vpow.pop %v623
    %v625 = vld [vmem:[#allocation8] sm:$0xff]
    %v626 = vld [vmem:[#allocation8 + $0x8] sm:$0xff]
    %v627 = vld [vmem:[#allocation8 + $0x10] sm:$0xff]
    %v628 = vld [vmem:[#allocation8 + $0x18] sm:$0xff]
    %v629 = vld [vmem:[#allocation8 + $0x20] sm:$0xff]
    %v630 = vld [vmem:[#allocation8 + $0x28] sm:$0xff]
    %v631 = vld [vmem:[#allocation8 + $0x30] sm:$0xff]
    %v632 = vld [vmem:[#allocation8 + $0x38] sm:$0xff]
    %v633 = vld [vmem:[#allocation8 + $0x40] sm:$0xff]
    %v634 = vld [vmem:[#allocation8 + $0x48] sm:$0xff]
    %v635 = vld [vmem:[#allocation8 + $0x50] sm:$0xff]
    %v636 = vld [vmem:[#allocation8 + $0x58] sm:$0xff]
    %v637 = vld [vmem:[#allocation8 + $0x60] sm:$0xff]
    %v638 = vld [vmem:[#allocation8 + $0x68] sm:$0xff]
    %v639 = vld [vmem:[#allocation8 + $0x70] sm:$0xff]
    %v640 = vld [vmem:[#allocation8 + $0x78] sm:$0xff]
    %641 = vmatprep.subr.mxu0 0.0
    %v642 = vand.u32 %v640, 4294901760
    %643 = vmatpush1.msra.mxu0 %v642
    %644 = vmatprep.subr.mxu0 0.0
    %v645 = vand.u32 %v639, 4294901760
    %646 = vmatpush1.msra.mxu0 %v645
    %647 = vmatprep.subr.mxu0 0.0
    %v648 = vand.u32 %v638, 4294901760
    %649 = vmatpush1.msra.mxu0 %v648
    %650 = vmatprep.subr.mxu0 0.0
    %v651 = vand.u32 %v637, 4294901760
    %652 = vmatpush1.msra.mxu0 %v651
    %653 = vmatprep.subr.mxu0 0.0
    %v654 = vand.u32 %v636, 4294901760
    %655 = vmatpush1.msra.mxu0 %v654
    %656 = vmatprep.subr.mxu0 0.0
    %v657 = vand.u32 %v635, 4294901760
    %658 = vmatpush1.msra.mxu0 %v657
    %659 = vmatprep.subr.mxu0 0.0
    %v660 = vand.u32 %v634, 4294901760
    %661 = vmatpush1.msra.mxu0 %v660
    %662 = vmatprep.subr.mxu0 0.0
    %v663 = vand.u32 %v633, 4294901760
    %664 = vmatpush1.msra.mxu0 %v663
    %665 = vmatprep.subr.mxu0 0.0
    %v666 = vand.u32 %v632, 4294901760
    %667 = vmatpush1.msra.mxu0 %v666
    %668 = vmatprep.subr.mxu0 0.0
    %v669 = vand.u32 %v631, 4294901760
    %670 = vmatpush1.msra.mxu0 %v669
    %671 = vmatprep.subr.mxu0 0.0
    %v672 = vand.u32 %v630, 4294901760
    %673 = vmatpush1.msra.mxu0 %v672
    %674 = vmatprep.subr.mxu0 0.0
    %v675 = vand.u32 %v629, 4294901760
    %676 = vmatpush1.msra.mxu0 %v675
    %677 = vmatprep.subr.mxu0 0.0
    %v678 = vand.u32 %v628, 4294901760
    %679 = vmatpush1.msra.mxu0 %v678
    %680 = vmatprep.subr.mxu0 0.0
    %v681 = vand.u32 %v627, 4294901760
    %682 = vmatpush1.msra.mxu0 %v681
    %683 = vmatprep.subr.mxu0 0.0
    %v684 = vand.u32 %v626, 4294901760
    %685 = vmatpush1.msra.mxu0 %v684
    %686 = vmatprep.subr.mxu0 0.0
    %v687 = vand.u32 %v625, 4294901760
    %688 = vmatpush1.msra.mxu0 %v687
    %689 = vmatprep.subr.mxu0 0.0
    %690 = vmatpush2.msra.mxu0 0.0
    %691 = vmatprep.subr.mxu0 0.0
    %692 = vmatpush2.msra.mxu0 0.0
    %693 = vmatprep.subr.mxu0 0.0
    %694 = vmatpush2.msra.mxu0 0.0
    %695 = vmatprep.subr.mxu0 0.0
    %696 = vmatpush2.msra.mxu0 0.0
    %697 = vmatprep.subr.mxu0 0.0
    %698 = vmatpush2.msra.mxu0 0.0
    %699 = vmatprep.subr.mxu0 0.0
    %700 = vmatpush2.msra.mxu0 0.0
    %701 = vmatprep.subr.mxu0 0.0
    %702 = vmatpush2.msra.mxu0 0.0
    %703 = vmatprep.subr.mxu0 0.0
    %704 = vmatpush2.msra.mxu0 0.0
    %705 = vmatprep.subr.mxu0 0.0
    %706 = vmatpush2.msra.mxu0 0.0
    %707 = vmatprep.subr.mxu0 0.0
    %708 = vmatpush2.msra.mxu0 0.0
    %709 = vmatprep.subr.mxu0 0.0
    %710 = vmatpush2.msra.mxu0 0.0
    %711 = vmatprep.subr.mxu0 0.0
    %712 = vmatpush2.msra.mxu0 0.0
    %713 = vmatprep.subr.mxu0 0.0
    %714 = vmatpush2.msra.mxu0 0.0
    %715 = vmatprep.subr.mxu0 0.0
    %716 = vmatpush2.msra.mxu0 0.0
    %717 = vmatprep.subr.mxu0 0.0
    %718 = vmatpush2.msra.mxu0 0.0
    %719 = vmatprep.subr.mxu0 0.0
    %720 = vmatpush2.msra.mxu0 0.0
    %721 = vmatprep.mubr.f32.mxu0 0.0
    %v722 = vand.u32 %v624, 4294901760
    %v723 = vsub.f32 %v624, %v722
    %v724 = vand.u32 %v723, 4294901760
    %v725 = vsub.f32 %v723, %v724
    %v726 = vand.u32 %v725, 4294901760
    %727 = vmatmul.mubr.f32.gmra.mxu0 %v726
    %v728 = vpop.f32.mrf.mxu0
    %v729 = vadd.f32 0.0, %v728
    %v730 = vpop.f32.mrf.mxu0
    %731 = vdwg.mxu0
    %732 = vmatprep.subr.mxu0 0.0
    %v733 = vand.u32 %v640, 4294901760
    %v734 = vsub.f32 %v640, %v733
    %v735 = vand.u32 %v734, 4294901760
    %v736 = vsub.f32 %v734, %v735
    %v737 = vand.u32 %v736, 4294901760
    %738 = vmatpush1.msra.mxu0 %v737
    %739 = vmatprep.subr.mxu0 0.0
    %v740 = vand.u32 %v639, 4294901760
    %v741 = vsub.f32 %v639, %v740
    %v742 = vand.u32 %v741, 4294901760
    %v743 = vsub.f32 %v741, %v742
    %v744 = vand.u32 %v743, 4294901760
    %745 = vmatpush1.msra.mxu0 %v744
    %746 = vmatprep.subr.mxu0 0.0
    %v747 = vand.u32 %v638, 4294901760
    %v748 = vsub.f32 %v638, %v747
    %v749 = vand.u32 %v748, 4294901760
    %v750 = vsub.f32 %v748, %v749
    %v751 = vand.u32 %v750, 4294901760
    %752 = vmatpush1.msra.mxu0 %v751
    %753 = vmatprep.subr.mxu0 0.0
    %v754 = vand.u32 %v637, 4294901760
    %v755 = vsub.f32 %v637, %v754
    %v756 = vand.u32 %v755, 4294901760
    %v757 = vsub.f32 %v755, %v756
    %v758 = vand.u32 %v757, 4294901760
    %759 = vmatpush1.msra.mxu0 %v758
    %760 = vmatprep.subr.mxu0 0.0
    %v761 = vand.u32 %v636, 4294901760
    %v762 = vsub.f32 %v636, %v761
    %v763 = vand.u32 %v762, 4294901760
    %v764 = vsub.f32 %v762, %v763
    %v765 = vand.u32 %v764, 4294901760
    %766 = vmatpush1.msra.mxu0 %v765
    %767 = vmatprep.subr.mxu0 0.0
    %v768 = vand.u32 %v635, 4294901760
    %v769 = vsub.f32 %v635, %v768
    %v770 = vand.u32 %v769, 4294901760
    %v771 = vsub.f32 %v769, %v770
    %v772 = vand.u32 %v771, 4294901760
    %773 = vmatpush1.msra.mxu0 %v772
    %774 = vmatprep.subr.mxu0 0.0
    %v775 = vand.u32 %v634, 4294901760
    %v776 = vsub.f32 %v634, %v775
    %v777 = vand.u32 %v776, 4294901760
    %v778 = vsub.f32 %v776, %v777
    %v779 = vand.u32 %v778, 4294901760
    %780 = vmatpush1.msra.mxu0 %v779
    %781 = vmatprep.subr.mxu0 0.0
    %v782 = vand.u32 %v633, 4294901760
    %v783 = vsub.f32 %v633, %v782
    %v784 = vand.u32 %v783, 4294901760
    %v785 = vsub.f32 %v783, %v784
    %v786 = vand.u32 %v785, 4294901760
    %787 = vmatpush1.msra.mxu0 %v786
    %788 = vmatprep.subr.mxu0 0.0
    %v789 = vand.u32 %v632, 4294901760
    %v790 = vsub.f32 %v632, %v789
    %v791 = vand.u32 %v790, 4294901760
    %v792 = vsub.f32 %v790, %v791
    %v793 = vand.u32 %v792, 4294901760
    %794 = vmatpush1.msra.mxu0 %v793
    %795 = vmatprep.subr.mxu0 0.0
    %v796 = vand.u32 %v631, 4294901760
    %v797 = vsub.f32 %v631, %v796
    %v798 = vand.u32 %v797, 4294901760
    %v799 = vsub.f32 %v797, %v798
    %v800 = vand.u32 %v799, 4294901760
    %801 = vmatpush1.msra.mxu0 %v800
    %802 = vmatprep.subr.mxu0 0.0
    %v803 = vand.u32 %v630, 4294901760
    %v804 = vsub.f32 %v630, %v803
    %v805 = vand.u32 %v804, 4294901760
    %v806 = vsub.f32 %v804, %v805
    %v807 = vand.u32 %v806, 4294901760
    %808 = vmatpush1.msra.mxu0 %v807
    %809 = vmatprep.subr.mxu0 0.0
    %v810 = vand.u32 %v629, 4294901760
    %v811 = vsub.f32 %v629, %v810
    %v812 = vand.u32 %v811, 4294901760
    %v813 = vsub.f32 %v811, %v812
    %v814 = vand.u32 %v813, 4294901760
    %815 = vmatpush1.msra.mxu0 %v814
    %816 = vmatprep.subr.mxu0 0.0
    %v817 = vand.u32 %v628, 4294901760
    %v818 = vsub.f32 %v628, %v817
    %v819 = vand.u32 %v818, 4294901760
    %v820 = vsub.f32 %v818, %v819
    %v821 = vand.u32 %v820, 4294901760
    %822 = vmatpush1.msra.mxu0 %v821
    %823 = vmatprep.subr.mxu0 0.0
    %v824 = vand.u32 %v627, 4294901760
    %v825 = vsub.f32 %v627, %v824
    %v826 = vand.u32 %v825, 4294901760
    %v827 = vsub.f32 %v825, %v826
    %v828 = vand.u32 %v827, 4294901760
    %829 = vmatpush1.msra.mxu0 %v828
    %830 = vmatprep.subr.mxu0 0.0
    %v831 = vand.u32 %v626, 4294901760
    %v832 = vsub.f32 %v626, %v831
    %v833 = vand.u32 %v832, 4294901760
    %v834 = vsub.f32 %v832, %v833
    %v835 = vand.u32 %v834, 4294901760
    %836 = vmatpush1.msra.mxu0 %v835
    %837 = vmatprep.subr.mxu0 0.0
    %v838 = vand.u32 %v625, 4294901760
    %v839 = vsub.f32 %v625, %v838
    %v840 = vand.u32 %v839, 4294901760
    %v841 = vsub.f32 %v839, %v840
    %v842 = vand.u32 %v841, 4294901760
    %843 = vmatpush1.msra.mxu0 %v842
    %844 = vmatprep.subr.mxu0 0.0
    %845 = vmatpush2.msra.mxu0 0.0
    %846 = vmatprep.subr.mxu0 0.0
    %847 = vmatpush2.msra.mxu0 0.0
    %848 = vmatprep.subr.mxu0 0.0
    %849 = vmatpush2.msra.mxu0 0.0
    %850 = vmatprep.subr.mxu0 0.0
    %851 = vmatpush2.msra.mxu0 0.0
    %852 = vmatprep.subr.mxu0 0.0
    %853 = vmatpush2.msra.mxu0 0.0
    %854 = vmatprep.subr.mxu0 0.0
    %855 = vmatpush2.msra.mxu0 0.0
    %856 = vmatprep.subr.mxu0 0.0
    %857 = vmatpush2.msra.mxu0 0.0
    %858 = vmatprep.subr.mxu0 0.0
    %859 = vmatpush2.msra.mxu0 0.0
    %860 = vmatprep.subr.mxu0 0.0
    %861 = vmatpush2.msra.mxu0 0.0
    %862 = vmatprep.subr.mxu0 0.0
    %863 = vmatpush2.msra.mxu0 0.0
    %864 = vmatprep.subr.mxu0 0.0
    %865 = vmatpush2.msra.mxu0 0.0
    %866 = vmatprep.subr.mxu0 0.0
    %867 = vmatpush2.msra.mxu0 0.0
    %868 = vmatprep.subr.mxu0 0.0
    %869 = vmatpush2.msra.mxu0 0.0
    %870 = vmatprep.subr.mxu0 0.0
    %871 = vmatpush2.msra.mxu0 0.0
    %872 = vmatprep.subr.mxu0 0.0
    %873 = vmatpush2.msra.mxu0 0.0
    %874 = vmatprep.subr.mxu0 0.0
    %875 = vmatpush2.msra.mxu0 0.0
    %876 = vmatprep.mubr.f32.mxu0 0.0
    %v877 = vand.u32 %v624, 4294901760
    %878 = vmatmul.mubr.f32.gmra.mxu0 %v877
    %v879 = vpop.f32.mrf.mxu0
    %v880 = vadd.f32 %v729, %v879
    %v881 = vpop.f32.mrf.mxu0
    %882 = vdwg.mxu0
    %883 = vmatprep.subr.mxu0 0.0
    %v884 = vand.u32 %v640, 4294901760
    %v885 = vsub.f32 %v640, %v884
    %886 = vmatpush1.msra.mxu0 %v885
    %887 = vmatprep.subr.mxu0 0.0
    %v888 = vand.u32 %v639, 4294901760
    %v889 = vsub.f32 %v639, %v888
    %890 = vmatpush1.msra.mxu0 %v889
    %891 = vmatprep.subr.mxu0 0.0
    %v892 = vand.u32 %v638, 4294901760
    %v893 = vsub.f32 %v638, %v892
    %894 = vmatpush1.msra.mxu0 %v893
    %895 = vmatprep.subr.mxu0 0.0
    %v896 = vand.u32 %v637, 4294901760
    %v897 = vsub.f32 %v637, %v896
    %898 = vmatpush1.msra.mxu0 %v897
    %899 = vmatprep.subr.mxu0 0.0
    %v900 = vand.u32 %v636, 4294901760
    %v901 = vsub.f32 %v636, %v900
    %902 = vmatpush1.msra.mxu0 %v901
    %903 = vmatprep.subr.mxu0 0.0
    %v904 = vand.u32 %v635, 4294901760
    %v905 = vsub.f32 %v635, %v904
    %906 = vmatpush1.msra.mxu0 %v905
    %907 = vmatprep.subr.mxu0 0.0
    %v908 = vand.u32 %v634, 4294901760
    %v909 = vsub.f32 %v634, %v908
    %910 = vmatpush1.msra.mxu0 %v909
    %911 = vmatprep.subr.mxu0 0.0
    %v912 = vand.u32 %v633, 4294901760
    %v913 = vsub.f32 %v633, %v912
    %914 = vmatpush1.msra.mxu0 %v913
    %915 = vmatprep.subr.mxu0 0.0
    %v916 = vand.u32 %v632, 4294901760
    %v917 = vsub.f32 %v632, %v916
    %918 = vmatpush1.msra.mxu0 %v917
    %919 = vmatprep.subr.mxu0 0.0
    %v920 = vand.u32 %v631, 4294901760
    %v921 = vsub.f32 %v631, %v920
    %922 = vmatpush1.msra.mxu0 %v921
    %923 = vmatprep.subr.mxu0 0.0
    %v924 = vand.u32 %v630, 4294901760
    %v925 = vsub.f32 %v630, %v924
    %926 = vmatpush1.msra.mxu0 %v925
    %927 = vmatprep.subr.mxu0 0.0
    %v928 = vand.u32 %v629, 4294901760
    %v929 = vsub.f32 %v629, %v928
    %930 = vmatpush1.msra.mxu0 %v929
    %931 = vmatprep.subr.mxu0 0.0
    %v932 = vand.u32 %v628, 4294901760
    %v933 = vsub.f32 %v628, %v932
    %934 = vmatpush1.msra.mxu0 %v933
    %935 = vmatprep.subr.mxu0 0.0
    %v936 = vand.u32 %v627, 4294901760
    %v937 = vsub.f32 %v627, %v936
    %938 = vmatpush1.msra.mxu0 %v937
    %939 = vmatprep.subr.mxu0 0.0
    %v940 = vand.u32 %v626, 4294901760
    %v941 = vsub.f32 %v626, %v940
    %942 = vmatpush1.msra.mxu0 %v941
    %943 = vmatprep.subr.mxu0 0.0
    %v944 = vand.u32 %v625, 4294901760
    %v945 = vsub.f32 %v625, %v944
    %946 = vmatpush1.msra.mxu0 %v945
    %947 = vmatprep.subr.mxu0 0.0
    %948 = vmatpush2.msra.mxu0 0.0
    %949 = vmatprep.subr.mxu0 0.0
    %950 = vmatpush2.msra.mxu0 0.0
    %951 = vmatprep.subr.mxu0 0.0
    %952 = vmatpush2.msra.mxu0 0.0
    %953 = vmatprep.subr.mxu0 0.0
    %954 = vmatpush2.msra.mxu0 0.0
    %955 = vmatprep.subr.mxu0 0.0
    %956 = vmatpush2.msra.mxu0 0.0
    %957 = vmatprep.subr.mxu0 0.0
    %958 = vmatpush2.msra.mxu0 0.0
    %959 = vmatprep.subr.mxu0 0.0
    %960 = vmatpush2.msra.mxu0 0.0
    %961 = vmatprep.subr.mxu0 0.0
    %962 = vmatpush2.msra.mxu0 0.0
    %963 = vmatprep.subr.mxu0 0.0
    %964 = vmatpush2.msra.mxu0 0.0
    %965 = vmatprep.subr.mxu0 0.0
    %966 = vmatpush2.msra.mxu0 0.0
    %967 = vmatprep.subr.mxu0 0.0
    %968 = vmatpush2.msra.mxu0 0.0
    %969 = vmatprep.subr.mxu0 0.0
    %970 = vmatpush2.msra.mxu0 0.0
    %971 = vmatprep.subr.mxu0 0.0
    %972 = vmatpush2.msra.mxu0 0.0
    %973 = vmatprep.subr.mxu0 0.0
    %974 = vmatpush2.msra.mxu0 0.0
    %975 = vmatprep.subr.mxu0 0.0
    %976 = vmatpush2.msra.mxu0 0.0
    %977 = vmatprep.subr.mxu0 0.0
    %978 = vmatpush2.msra.mxu0 0.0
    %979 = vmatprep.mubr.f32.mxu0 0.0
    %v980 = vand.u32 %v624, 4294901760
    %v981 = vsub.f32 %v624, %v980
    %982 = vmatmul.mubr.f32.gmra.mxu0 %v981
    %v983 = vpop.f32.mrf.mxu0
    %v984 = vadd.f32 %v880, %v983
    %v985 = vpop.f32.mrf.mxu0
    %986 = vdwg.mxu0
    %987 = vmatprep.subr.mxu0 0.0
    %v988 = vand.u32 %v640, 4294901760
    %989 = vmatpush1.msra.mxu0 %v988
    %990 = vmatprep.subr.mxu0 0.0
    %v991 = vand.u32 %v639, 4294901760
    %992 = vmatpush1.msra.mxu0 %v991
    %993 = vmatprep.subr.mxu0 0.0
    %v994 = vand.u32 %v638, 4294901760
    %995 = vmatpush1.msra.mxu0 %v994
    %996 = vmatprep.subr.mxu0 0.0
    %v997 = vand.u32 %v637, 4294901760
    %998 = vmatpush1.msra.mxu0 %v997
    %999 = vmatprep.subr.mxu0 0.0
    %v1000 = vand.u32 %v636, 4294901760
    %1001 = vmatpush1.msra.mxu0 %v1000
    %1002 = vmatprep.subr.mxu0 0.0
    %v1003 = vand.u32 %v635, 4294901760
    %1004 = vmatpush1.msra.mxu0 %v1003
    %1005 = vmatprep.subr.mxu0 0.0
    %v1006 = vand.u32 %v634, 4294901760
    %1007 = vmatpush1.msra.mxu0 %v1006
    %1008 = vmatprep.subr.mxu0 0.0
    %v1009 = vand.u32 %v633, 4294901760
    %1010 = vmatpush1.msra.mxu0 %v1009
    %1011 = vmatprep.subr.mxu0 0.0
    %v1012 = vand.u32 %v632, 4294901760
    %1013 = vmatpush1.msra.mxu0 %v1012
    %1014 = vmatprep.subr.mxu0 0.0
    %v1015 = vand.u32 %v631, 4294901760
    %1016 = vmatpush1.msra.mxu0 %v1015
    %1017 = vmatprep.subr.mxu0 0.0
    %v1018 = vand.u32 %v630, 4294901760
    %1019 = vmatpush1.msra.mxu0 %v1018
    %1020 = vmatprep.subr.mxu0 0.0
    %v1021 = vand.u32 %v629, 4294901760
    %1022 = vmatpush1.msra.mxu0 %v1021
    %1023 = vmatprep.subr.mxu0 0.0
    %v1024 = vand.u32 %v628, 4294901760
    %1025 = vmatpush1.msra.mxu0 %v1024
    %1026 = vmatprep.subr.mxu0 0.0
    %v1027 = vand.u32 %v627, 4294901760
    %1028 = vmatpush1.msra.mxu0 %v1027
    %1029 = vmatprep.subr.mxu0 0.0
    %v1030 = vand.u32 %v626, 4294901760
    %1031 = vmatpush1.msra.mxu0 %v1030
    %1032 = vmatprep.subr.mxu0 0.0
    %v1033 = vand.u32 %v625, 4294901760
    %1034 = vmatpush1.msra.mxu0 %v1033
    %1035 = vmatprep.subr.mxu0 0.0
    %1036 = vmatpush2.msra.mxu0 0.0
    %1037 = vmatprep.subr.mxu0 0.0
    %1038 = vmatpush2.msra.mxu0 0.0
    %1039 = vmatprep.subr.mxu0 0.0
    %1040 = vmatpush2.msra.mxu0 0.0
    %1041 = vmatprep.subr.mxu0 0.0
    %1042 = vmatpush2.msra.mxu0 0.0
    %1043 = vmatprep.subr.mxu0 0.0
    %1044 = vmatpush2.msra.mxu0 0.0
    %1045 = vmatprep.subr.mxu0 0.0
    %1046 = vmatpush2.msra.mxu0 0.0
    %1047 = vmatprep.subr.mxu0 0.0
    %1048 = vmatpush2.msra.mxu0 0.0
    %1049 = vmatprep.subr.mxu0 0.0
    %1050 = vmatpush2.msra.mxu0 0.0
    %1051 = vmatprep.subr.mxu0 0.0
    %1052 = vmatpush2.msra.mxu0 0.0
    %1053 = vmatprep.subr.mxu0 0.0
    %1054 = vmatpush2.msra.mxu0 0.0
    %1055 = vmatprep.subr.mxu0 0.0
    %1056 = vmatpush2.msra.mxu0 0.0
    %1057 = vmatprep.subr.mxu0 0.0
    %1058 = vmatpush2.msra.mxu0 0.0
    %1059 = vmatprep.subr.mxu0 0.0
    %1060 = vmatpush2.msra.mxu0 0.0
    %1061 = vmatprep.subr.mxu0 0.0
    %1062 = vmatpush2.msra.mxu0 0.0
    %1063 = vmatprep.subr.mxu0 0.0
    %1064 = vmatpush2.msra.mxu0 0.0
    %1065 = vmatprep.subr.mxu0 0.0
    %1066 = vmatpush2.msra.mxu0 0.0
    %1067 = vmatprep.mubr.f32.mxu0 0.0
    %v1068 = vand.u32 %v624, 4294901760
    %v1069 = vsub.f32 %v624, %v1068
    %v1070 = vand.u32 %v1069, 4294901760
    %1071 = vmatmul.mubr.f32.gmra.mxu0 %v1070
    %v1072 = vpop.f32.mrf.mxu0
    %v1073 = vadd.f32 %v984, %v1072
    %v1074 = vpop.f32.mrf.mxu0
    %1075 = vdwg.mxu0
    %1076 = vmatprep.subr.mxu0 0.0
    %v1077 = vand.u32 %v640, 4294901760
    %v1078 = vsub.f32 %v640, %v1077
    %v1079 = vand.u32 %v1078, 4294901760
    %1080 = vmatpush1.msra.mxu0 %v1079
    %1081 = vmatprep.subr.mxu0 0.0
    %v1082 = vand.u32 %v639, 4294901760
    %v1083 = vsub.f32 %v639, %v1082
    %v1084 = vand.u32 %v1083, 4294901760
    %1085 = vmatpush1.msra.mxu0 %v1084
    %1086 = vmatprep.subr.mxu0 0.0
    %v1087 = vand.u32 %v638, 4294901760
    %v1088 = vsub.f32 %v638, %v1087
    %v1089 = vand.u32 %v1088, 4294901760
    %1090 = vmatpush1.msra.mxu0 %v1089
    %1091 = vmatprep.subr.mxu0 0.0
    %v1092 = vand.u32 %v637, 4294901760
    %v1093 = vsub.f32 %v637, %v1092
    %v1094 = vand.u32 %v1093, 4294901760
    %1095 = vmatpush1.msra.mxu0 %v1094
    %1096 = vmatprep.subr.mxu0 0.0
    %v1097 = vand.u32 %v636, 4294901760
    %v1098 = vsub.f32 %v636, %v1097
    %v1099 = vand.u32 %v1098, 4294901760
    %1100 = vmatpush1.msra.mxu0 %v1099
    %1101 = vmatprep.subr.mxu0 0.0
    %v1102 = vand.u32 %v635, 4294901760
    %v1103 = vsub.f32 %v635, %v1102
    %v1104 = vand.u32 %v1103, 4294901760
    %1105 = vmatpush1.msra.mxu0 %v1104
    %1106 = vmatprep.subr.mxu0 0.0
    %v1107 = vand.u32 %v634, 4294901760
    %v1108 = vsub.f32 %v634, %v1107
    %v1109 = vand.u32 %v1108, 4294901760
    %1110 = vmatpush1.msra.mxu0 %v1109
    %1111 = vmatprep.subr.mxu0 0.0
    %v1112 = vand.u32 %v633, 4294901760
    %v1113 = vsub.f32 %v633, %v1112
    %v1114 = vand.u32 %v1113, 4294901760
    %1115 = vmatpush1.msra.mxu0 %v1114
    %1116 = vmatprep.subr.mxu0 0.0
    %v1117 = vand.u32 %v632, 4294901760
    %v1118 = vsub.f32 %v632, %v1117
    %v1119 = vand.u32 %v1118, 4294901760
    %1120 = vmatpush1.msra.mxu0 %v1119
    %1121 = vmatprep.subr.mxu0 0.0
    %v1122 = vand.u32 %v631, 4294901760
    %v1123 = vsub.f32 %v631, %v1122
    %v1124 = vand.u32 %v1123, 4294901760
    %1125 = vmatpush1.msra.mxu0 %v1124
    %1126 = vmatprep.subr.mxu0 0.0
    %v1127 = vand.u32 %v630, 4294901760
    %v1128 = vsub.f32 %v630, %v1127
    %v1129 = vand.u32 %v1128, 4294901760
    %1130 = vmatpush1.msra.mxu0 %v1129
    %1131 = vmatprep.subr.mxu0 0.0
    %v1132 = vand.u32 %v629, 4294901760
    %v1133 = vsub.f32 %v629, %v1132
    %v1134 = vand.u32 %v1133, 4294901760
    %1135 = vmatpush1.msra.mxu0 %v1134
    %1136 = vmatprep.subr.mxu0 0.0
    %v1137 = vand.u32 %v628, 4294901760
    %v1138 = vsub.f32 %v628, %v1137
    %v1139 = vand.u32 %v1138, 4294901760
    %1140 = vmatpush1.msra.mxu0 %v1139
    %1141 = vmatprep.subr.mxu0 0.0
    %v1142 = vand.u32 %v627, 4294901760
    %v1143 = vsub.f32 %v627, %v1142
    %v1144 = vand.u32 %v1143, 4294901760
    %1145 = vmatpush1.msra.mxu0 %v1144
    %1146 = vmatprep.subr.mxu0 0.0
    %v1147 = vand.u32 %v626, 4294901760
    %v1148 = vsub.f32 %v626, %v1147
    %v1149 = vand.u32 %v1148, 4294901760
    %1150 = vmatpush1.msra.mxu0 %v1149
    %1151 = vmatprep.subr.mxu0 0.0
    %v1152 = vand.u32 %v625, 4294901760
    %v1153 = vsub.f32 %v625, %v1152
    %v1154 = vand.u32 %v1153, 4294901760
    %1155 = vmatpush1.msra.mxu0 %v1154
    %1156 = vmatprep.subr.mxu0 0.0
    %1157 = vmatpush2.msra.mxu0 0.0
    %1158 = vmatprep.subr.mxu0 0.0
    %1159 = vmatpush2.msra.mxu0 0.0
    %1160 = vmatprep.subr.mxu0 0.0
    %1161 = vmatpush2.msra.mxu0 0.0
    %1162 = vmatprep.subr.mxu0 0.0
    %1163 = vmatpush2.msra.mxu0 0.0
    %1164 = vmatprep.subr.mxu0 0.0
    %1165 = vmatpush2.msra.mxu0 0.0
    %1166 = vmatprep.subr.mxu0 0.0
    %1167 = vmatpush2.msra.mxu0 0.0
    %1168 = vmatprep.subr.mxu0 0.0
    %1169 = vmatpush2.msra.mxu0 0.0
    %1170 = vmatprep.subr.mxu0 0.0
    %1171 = vmatpush2.msra.mxu0 0.0
    %1172 = vmatprep.subr.mxu0 0.0
    %1173 = vmatpush2.msra.mxu0 0.0
    %1174 = vmatprep.subr.mxu0 0.0
    %1175 = vmatpush2.msra.mxu0 0.0
    %1176 = vmatprep.subr.mxu0 0.0
    %1177 = vmatpush2.msra.mxu0 0.0
    %1178 = vmatprep.subr.mxu0 0.0
    %1179 = vmatpush2.msra.mxu0 0.0
    %1180 = vmatprep.subr.mxu0 0.0
    %1181 = vmatpush2.msra.mxu0 0.0
    %1182 = vmatprep.subr.mxu0 0.0
    %1183 = vmatpush2.msra.mxu0 0.0
    %1184 = vmatprep.subr.mxu0 0.0
    %1185 = vmatpush2.msra.mxu0 0.0
    %1186 = vmatprep.subr.mxu0 0.0
    %1187 = vmatpush2.msra.mxu0 0.0
    %1188 = vmatprep.mubr.f32.mxu0 0.0
    %v1189 = vand.u32 %v624, 4294901760
    %1190 = vmatmul.mubr.f32.gmra.mxu0 %v1189
    %v1191 = vpop.f32.mrf.mxu0
    %v1192 = vadd.f32 %v1073, %v1191
    %v1193 = vpop.f32.mrf.mxu0
    %1194 = vdwg.mxu0
    %1195 = vmatprep.subr.mxu0 0.0
    %v1196 = vand.u32 %v640, 4294901760
    %1197 = vmatpush1.msra.mxu0 %v1196
    %1198 = vmatprep.subr.mxu0 0.0
    %v1199 = vand.u32 %v639, 4294901760
    %1200 = vmatpush1.msra.mxu0 %v1199
    %1201 = vmatprep.subr.mxu0 0.0
    %v1202 = vand.u32 %v638, 4294901760
    %1203 = vmatpush1.msra.mxu0 %v1202
    %1204 = vmatprep.subr.mxu0 0.0
    %v1205 = vand.u32 %v637, 4294901760
    %1206 = vmatpush1.msra.mxu0 %v1205
    %1207 = vmatprep.subr.mxu0 0.0
    %v1208 = vand.u32 %v636, 4294901760
    %1209 = vmatpush1.msra.mxu0 %v1208
    %1210 = vmatprep.subr.mxu0 0.0
    %v1211 = vand.u32 %v635, 4294901760
    %1212 = vmatpush1.msra.mxu0 %v1211
    %1213 = vmatprep.subr.mxu0 0.0
    %v1214 = vand.u32 %v634, 4294901760
    %1215 = vmatpush1.msra.mxu0 %v1214
    %1216 = vmatprep.subr.mxu0 0.0
    %v1217 = vand.u32 %v633, 4294901760
    %1218 = vmatpush1.msra.mxu0 %v1217
    %1219 = vmatprep.subr.mxu0 0.0
    %v1220 = vand.u32 %v632, 4294901760
    %1221 = vmatpush1.msra.mxu0 %v1220
    %1222 = vmatprep.subr.mxu0 0.0
    %v1223 = vand.u32 %v631, 4294901760
    %1224 = vmatpush1.msra.mxu0 %v1223
    %1225 = vmatprep.subr.mxu0 0.0
    %v1226 = vand.u32 %v630, 4294901760
    %1227 = vmatpush1.msra.mxu0 %v1226
    %1228 = vmatprep.subr.mxu0 0.0
    %v1229 = vand.u32 %v629, 4294901760
    %1230 = vmatpush1.msra.mxu0 %v1229
    %1231 = vmatprep.subr.mxu0 0.0
    %v1232 = vand.u32 %v628, 4294901760
    %1233 = vmatpush1.msra.mxu0 %v1232
    %1234 = vmatprep.subr.mxu0 0.0
    %v1235 = vand.u32 %v627, 4294901760
    %1236 = vmatpush1.msra.mxu0 %v1235
    %1237 = vmatprep.subr.mxu0 0.0
    %v1238 = vand.u32 %v626, 4294901760
    %1239 = vmatpush1.msra.mxu0 %v1238
    %1240 = vmatprep.subr.mxu0 0.0
    %v1241 = vand.u32 %v625, 4294901760
    %1242 = vmatpush1.msra.mxu0 %v1241
    %1243 = vmatprep.subr.mxu0 0.0
    %1244 = vmatpush2.msra.mxu0 0.0
    %1245 = vmatprep.subr.mxu0 0.0
    %1246 = vmatpush2.msra.mxu0 0.0
    %1247 = vmatprep.subr.mxu0 0.0
    %1248 = vmatpush2.msra.mxu0 0.0
    %1249 = vmatprep.subr.mxu0 0.0
    %1250 = vmatpush2.msra.mxu0 0.0
    %1251 = vmatprep.subr.mxu0 0.0
    %1252 = vmatpush2.msra.mxu0 0.0
    %1253 = vmatprep.subr.mxu0 0.0
    %1254 = vmatpush2.msra.mxu0 0.0
    %1255 = vmatprep.subr.mxu0 0.0
    %1256 = vmatpush2.msra.mxu0 0.0
    %1257 = vmatprep.subr.mxu0 0.0
    %1258 = vmatpush2.msra.mxu0 0.0
    %1259 = vmatprep.subr.mxu0 0.0
    %1260 = vmatpush2.msra.mxu0 0.0
    %1261 = vmatprep.subr.mxu0 0.0
    %1262 = vmatpush2.msra.mxu0 0.0
    %1263 = vmatprep.subr.mxu0 0.0
    %1264 = vmatpush2.msra.mxu0 0.0
    %1265 = vmatprep.subr.mxu0 0.0
    %1266 = vmatpush2.msra.mxu0 0.0
    %1267 = vmatprep.subr.mxu0 0.0
    %1268 = vmatpush2.msra.mxu0 0.0
    %1269 = vmatprep.subr.mxu0 0.0
    %1270 = vmatpush2.msra.mxu0 0.0
    %1271 = vmatprep.subr.mxu0 0.0
    %1272 = vmatpush2.msra.mxu0 0.0
    %1273 = vmatprep.subr.mxu0 0.0
    %1274 = vmatpush2.msra.mxu0 0.0
    %1275 = vmatprep.mubr.f32.mxu0 0.0
    %v1276 = vand.u32 %v624, 4294901760
    %1277 = vmatmul.mubr.f32.gmra.mxu0 %v1276
    %v1278 = vpop.f32.mrf.mxu0
    %v1279 = vadd.f32 %v1192, %v1278
    %v1280 = vpop.f32.mrf.mxu0
    %1281 = vdwg.mxu0
    %v1282 = vstv %s98
    %vm1283 = vcmp.ne.f32.partialorder %v604, %v1282
    %v1284 = vrcp.pop %v1279
    %v1285 = vmul.f32 %v624, %v1284
    %v1286 = vsel %vm1283, %v1285, 0.0
    %v1287 = vld [vmem:[#allocation9] sm:$0xff]
    %v1288 = vld [vmem:[#allocation9 + $0x8] sm:$0xff]
    %v1289 = vld [vmem:[#allocation9 + $0x10] sm:$0xff]
    %v1290 = vld [vmem:[#allocation9 + $0x18] sm:$0xff]
    %v1291 = vld [vmem:[#allocation9 + $0x20] sm:$0xff]
    %v1292 = vld [vmem:[#allocation9 + $0x28] sm:$0xff]
    %v1293 = vld [vmem:[#allocation9 + $0x30] sm:$0xff]
    %v1294 = vld [vmem:[#allocation9 + $0x38] sm:$0xff]
    %v1295 = vld [vmem:[#allocation9 + $0x40] sm:$0xff]
    %v1296 = vld [vmem:[#allocation9 + $0x48] sm:$0xff]
    %v1297 = vld [vmem:[#allocation9 + $0x50] sm:$0xff]
    %v1298 = vld [vmem:[#allocation9 + $0x58] sm:$0xff]
    %v1299 = vld [vmem:[#allocation9 + $0x60] sm:$0xff]
    %v1300 = vld [vmem:[#allocation9 + $0x68] sm:$0xff]
    %v1301 = vld [vmem:[#allocation9 + $0x70] sm:$0xff]
    %v1302 = vld [vmem:[#allocation9 + $0x78] sm:$0xff]
    %v1303 = vld [vmem:[#allocation9 + $0x80] sm:$0xff]
    %v1304 = vld [vmem:[#allocation9 + $0x88] sm:$0xff]
    %v1305 = vld [vmem:[#allocation9 + $0x90] sm:$0xff]
    %v1306 = vld [vmem:[#allocation9 + $0x98] sm:$0xff]
    %v1307 = vld [vmem:[#allocation9 + $0xa0] sm:$0xff]
    %v1308 = vld [vmem:[#allocation9 + $0xa8] sm:$0xff]
    %v1309 = vld [vmem:[#allocation9 + $0xb0] sm:$0xff]
    %v1310 = vld [vmem:[#allocation9 + $0xb8] sm:$0xff]
    %v1311 = vld [vmem:[#allocation9 + $0xc0] sm:$0xff]
    %v1312 = vld [vmem:[#allocation9 + $0xc8] sm:$0xff]
    %v1313 = vld [vmem:[#allocation9 + $0xd0] sm:$0xff]
    %v1314 = vld [vmem:[#allocation9 + $0xd8] sm:$0xff]
    %v1315 = vld [vmem:[#allocation9 + $0xe0] sm:$0xff]
    %v1316 = vld [vmem:[#allocation9 + $0xe8] sm:$0xff]
    %v1317 = vld [vmem:[#allocation9 + $0xf0] sm:$0xff]
    %v1318 = vld [vmem:[#allocation9 + $0xf8] sm:$0xff]
    %v1319 = vand.u32 %v1318, 4294901760
    %1320 = vmatprep.subr.mxu0 %v1319
    %v1321 = vand.u32 %v1317, 4294901760
    %1322 = vmatpush1.msra.mxu0 %v1321
    %v1323 = vand.u32 %v1316, 4294901760
    %1324 = vmatprep.subr.mxu0 %v1323
    %v1325 = vand.u32 %v1315, 4294901760
    %1326 = vmatpush1.msra.mxu0 %v1325
    %v1327 = vand.u32 %v1314, 4294901760
    %1328 = vmatprep.subr.mxu0 %v1327
    %v1329 = vand.u32 %v1313, 4294901760
    %1330 = vmatpush1.msra.mxu0 %v1329
    %v1331 = vand.u32 %v1312, 4294901760
    %1332 = vmatprep.subr.mxu0 %v1331
    %v1333 = vand.u32 %v1311, 4294901760
    %1334 = vmatpush1.msra.mxu0 %v1333
    %v1335 = vand.u32 %v1310, 4294901760
    %1336 = vmatprep.subr.mxu0 %v1335
    %v1337 = vand.u32 %v1309, 4294901760
    %1338 = vmatpush1.msra.mxu0 %v1337
    %v1339 = vand.u32 %v1308, 4294901760
    %1340 = vmatprep.subr.mxu0 %v1339
    %v1341 = vand.u32 %v1307, 4294901760
    %1342 = vmatpush1.msra.mxu0 %v1341
    %v1343 = vand.u32 %v1306, 4294901760
    %1344 = vmatprep.subr.mxu0 %v1343
    %v1345 = vand.u32 %v1305, 4294901760
    %1346 = vmatpush1.msra.mxu0 %v1345
    %v1347 = vand.u32 %v1304, 4294901760
    %1348 = vmatprep.subr.mxu0 %v1347
    %v1349 = vand.u32 %v1303, 4294901760
    %1350 = vmatpush1.msra.mxu0 %v1349
    %v1351 = vand.u32 %v1302, 4294901760
    %1352 = vmatprep.subr.mxu0 %v1351
    %v1353 = vand.u32 %v1301, 4294901760
    %1354 = vmatpush1.msra.mxu0 %v1353
    %v1355 = vand.u32 %v1300, 4294901760
    %1356 = vmatprep.subr.mxu0 %v1355
    %v1357 = vand.u32 %v1299, 4294901760
    %1358 = vmatpush1.msra.mxu0 %v1357
    %v1359 = vand.u32 %v1298, 4294901760
    %1360 = vmatprep.subr.mxu0 %v1359
    %v1361 = vand.u32 %v1297, 4294901760
    %1362 = vmatpush1.msra.mxu0 %v1361
    %v1363 = vand.u32 %v1296, 4294901760
    %1364 = vmatprep.subr.mxu0 %v1363
    %v1365 = vand.u32 %v1295, 4294901760
    %1366 = vmatpush1.msra.mxu0 %v1365
    %v1367 = vand.u32 %v1294, 4294901760
    %1368 = vmatprep.subr.mxu0 %v1367
    %v1369 = vand.u32 %v1293, 4294901760
    %1370 = vmatpush1.msra.mxu0 %v1369
    %v1371 = vand.u32 %v1292, 4294901760
    %1372 = vmatprep.subr.mxu0 %v1371
    %v1373 = vand.u32 %v1291, 4294901760
    %1374 = vmatpush1.msra.mxu0 %v1373
    %v1375 = vand.u32 %v1290, 4294901760
    %1376 = vmatprep.subr.mxu0 %v1375
    %v1377 = vand.u32 %v1289, 4294901760
    %1378 = vmatpush1.msra.mxu0 %v1377
    %v1379 = vand.u32 %v1288, 4294901760
    %1380 = vmatprep.subr.mxu0 %v1379
    %v1381 = vand.u32 %v1287, 4294901760
    %1382 = vmatpush1.msra.mxu0 %v1381
    %1383 = vmatprep.subr.mxu0 0.0
    %1384 = vmatpush2.msra.mxu0 0.0
    %1385 = vmatprep.subr.mxu0 0.0
    %1386 = vmatpush2.msra.mxu0 0.0
    %1387 = vmatprep.subr.mxu0 0.0
    %1388 = vmatpush2.msra.mxu0 0.0
    %1389 = vmatprep.subr.mxu0 0.0
    %1390 = vmatpush2.msra.mxu0 0.0
    %1391 = vmatprep.subr.mxu0 0.0
    %1392 = vmatpush2.msra.mxu0 0.0
    %1393 = vmatprep.subr.mxu0 0.0
    %1394 = vmatpush2.msra.mxu0 0.0
    %1395 = vmatprep.subr.mxu0 0.0
    %1396 = vmatpush2.msra.mxu0 0.0
    %1397 = vmatprep.subr.mxu0 0.0
    %1398 = vmatpush2.msra.mxu0 0.0
    %1399 = vmatprep.subr.mxu0 0.0
    %1400 = vmatpush2.msra.mxu0 0.0
    %1401 = vmatprep.subr.mxu0 0.0
    %1402 = vmatpush2.msra.mxu0 0.0
    %1403 = vmatprep.subr.mxu0 0.0
    %1404 = vmatpush2.msra.mxu0 0.0
    %1405 = vmatprep.subr.mxu0 0.0
    %1406 = vmatpush2.msra.mxu0 0.0
    %1407 = vmatprep.subr.mxu0 0.0
    %1408 = vmatpush2.msra.mxu0 0.0
    %1409 = vmatprep.subr.mxu0 0.0
    %1410 = vmatpush2.msra.mxu0 0.0
    %1411 = vmatprep.subr.mxu0 0.0
    %1412 = vmatpush2.msra.mxu0 0.0
    %1413 = vmatprep.subr.mxu0 0.0
    %1414 = vmatpush2.msra.mxu0 0.0
    %1415 = vmatprep.mubr.f32.mxu0 0.0
    %v1416 = vand.u32 %v1286, 4294901760
    %v1417 = vsub.f32 %v1286, %v1416
    %v1418 = vand.u32 %v1417, 4294901760
    %v1419 = vsub.f32 %v1417, %v1418
    %v1420 = vand.u32 %v1419, 4294901760
    %1421 = vmatmul.mubr.f32.gmra.mxu0 %v1420
    %v1422 = vpop.f32.mrf.mxu0
    %v1423 = vadd.f32 0.0, %v1422
    %v1424 = vpop.f32.mrf.mxu0
    %v1425 = vadd.f32 0.0, %v1424
    %1426 = vdwg.mxu0
    %v1427 = vand.u32 %v1318, 4294901760
    %v1428 = vsub.f32 %v1318, %v1427
    %v1429 = vand.u32 %v1428, 4294901760
    %v1430 = vsub.f32 %v1428, %v1429
    %v1431 = vand.u32 %v1430, 4294901760
    %1432 = vmatprep.subr.mxu0 %v1431
    %v1433 = vand.u32 %v1317, 4294901760
    %v1434 = vsub.f32 %v1317, %v1433
    %v1435 = vand.u32 %v1434, 4294901760
    %v1436 = vsub.f32 %v1434, %v1435
    %v1437 = vand.u32 %v1436, 4294901760
    %1438 = vmatpush1.msra.mxu0 %v1437
    %v1439 = vand.u32 %v1316, 4294901760
    %v1440 = vsub.f32 %v1316, %v1439
    %v1441 = vand.u32 %v1440, 4294901760
    %v1442 = vsub.f32 %v1440, %v1441
    %v1443 = vand.u32 %v1442, 4294901760
    %1444 = vmatprep.subr.mxu0 %v1443
    %v1445 = vand.u32 %v1315, 4294901760
    %v1446 = vsub.f32 %v1315, %v1445
    %v1447 = vand.u32 %v1446, 4294901760
    %v1448 = vsub.f32 %v1446, %v1447
    %v1449 = vand.u32 %v1448, 4294901760
    %1450 = vmatpush1.msra.mxu0 %v1449
    %v1451 = vand.u32 %v1314, 4294901760
    %v1452 = vsub.f32 %v1314, %v1451
    %v1453 = vand.u32 %v1452, 4294901760
    %v1454 = vsub.f32 %v1452, %v1453
    %v1455 = vand.u32 %v1454, 4294901760
    %1456 = vmatprep.subr.mxu0 %v1455
    %v1457 = vand.u32 %v1313, 4294901760
    %v1458 = vsub.f32 %v1313, %v1457
    %v1459 = vand.u32 %v1458, 4294901760
    %v1460 = vsub.f32 %v1458, %v1459
    %v1461 = vand.u32 %v1460, 4294901760
    %1462 = vmatpush1.msra.mxu0 %v1461
    %v1463 = vand.u32 %v1312, 4294901760
    %v1464 = vsub.f32 %v1312, %v1463
    %v1465 = vand.u32 %v1464, 4294901760
    %v1466 = vsub.f32 %v1464, %v1465
    %v1467 = vand.u32 %v1466, 4294901760
    %1468 = vmatprep.subr.mxu0 %v1467
    %v1469 = vand.u32 %v1311, 4294901760
    %v1470 = vsub.f32 %v1311, %v1469
    %v1471 = vand.u32 %v1470, 4294901760
    %v1472 = vsub.f32 %v1470, %v1471
    %v1473 = vand.u32 %v1472, 4294901760
    %1474 = vmatpush1.msra.mxu0 %v1473
    %v1475 = vand.u32 %v1310, 4294901760
    %v1476 = vsub.f32 %v1310, %v1475
    %v1477 = vand.u32 %v1476, 4294901760
    %v1478 = vsub.f32 %v1476, %v1477
    %v1479 = vand.u32 %v1478, 4294901760
    %1480 = vmatprep.subr.mxu0 %v1479
    %v1481 = vand.u32 %v1309, 4294901760
    %v1482 = vsub.f32 %v1309, %v1481
    %v1483 = vand.u32 %v1482, 4294901760
    %v1484 = vsub.f32 %v1482, %v1483
    %v1485 = vand.u32 %v1484, 4294901760
    %1486 = vmatpush1.msra.mxu0 %v1485
    %v1487 = vand.u32 %v1308, 4294901760
    %v1488 = vsub.f32 %v1308, %v1487
    %v1489 = vand.u32 %v1488, 4294901760
    %v1490 = vsub.f32 %v1488, %v1489
    %v1491 = vand.u32 %v1490, 4294901760
    %1492 = vmatprep.subr.mxu0 %v1491
    %v1493 = vand.u32 %v1307, 4294901760
    %v1494 = vsub.f32 %v1307, %v1493
    %v1495 = vand.u32 %v1494, 4294901760
    %v1496 = vsub.f32 %v1494, %v1495
    %v1497 = vand.u32 %v1496, 4294901760
    %1498 = vmatpush1.msra.mxu0 %v1497
    %v1499 = vand.u32 %v1306, 4294901760
    %v1500 = vsub.f32 %v1306, %v1499
    %v1501 = vand.u32 %v1500, 4294901760
    %v1502 = vsub.f32 %v1500, %v1501
    %v1503 = vand.u32 %v1502, 4294901760
    %1504 = vmatprep.subr.mxu0 %v1503
    %v1505 = vand.u32 %v1305, 4294901760
    %v1506 = vsub.f32 %v1305, %v1505
    %v1507 = vand.u32 %v1506, 4294901760
    %v1508 = vsub.f32 %v1506, %v1507
    %v1509 = vand.u32 %v1508, 4294901760
    %1510 = vmatpush1.msra.mxu0 %v1509
    %v1511 = vand.u32 %v1304, 4294901760
    %v1512 = vsub.f32 %v1304, %v1511
    %v1513 = vand.u32 %v1512, 4294901760
    %v1514 = vsub.f32 %v1512, %v1513
    %v1515 = vand.u32 %v1514, 4294901760
    %1516 = vmatprep.subr.mxu0 %v1515
    %v1517 = vand.u32 %v1303, 4294901760
    %v1518 = vsub.f32 %v1303, %v1517
    %v1519 = vand.u32 %v1518, 4294901760
    %v1520 = vsub.f32 %v1518, %v1519
    %v1521 = vand.u32 %v1520, 4294901760
    %1522 = vmatpush1.msra.mxu0 %v1521
    %v1523 = vand.u32 %v1302, 4294901760
    %v1524 = vsub.f32 %v1302, %v1523
    %v1525 = vand.u32 %v1524, 4294901760
    %v1526 = vsub.f32 %v1524, %v1525
    %v1527 = vand.u32 %v1526, 4294901760
    %1528 = vmatprep.subr.mxu0 %v1527
    %v1529 = vand.u32 %v1301, 4294901760
    %v1530 = vsub.f32 %v1301, %v1529
    %v1531 = vand.u32 %v1530, 4294901760
    %v1532 = vsub.f32 %v1530, %v1531
    %v1533 = vand.u32 %v1532, 4294901760
    %1534 = vmatpush1.msra.mxu0 %v1533
    %v1535 = vand.u32 %v1300, 4294901760
    %v1536 = vsub.f32 %v1300, %v1535
    %v1537 = vand.u32 %v1536, 4294901760
    %v1538 = vsub.f32 %v1536, %v1537
    %v1539 = vand.u32 %v1538, 4294901760
    %1540 = vmatprep.subr.mxu0 %v1539
    %v1541 = vand.u32 %v1299, 4294901760
    %v1542 = vsub.f32 %v1299, %v1541
    %v1543 = vand.u32 %v1542, 4294901760
    %v1544 = vsub.f32 %v1542, %v1543
    %v1545 = vand.u32 %v1544, 4294901760
    %1546 = vmatpush1.msra.mxu0 %v1545
    %v1547 = vand.u32 %v1298, 4294901760
    %v1548 = vsub.f32 %v1298, %v1547
    %v1549 = vand.u32 %v1548, 4294901760
    %v1550 = vsub.f32 %v1548, %v1549
    %v1551 = vand.u32 %v1550, 4294901760
    %1552 = vmatprep.subr.mxu0 %v1551
    %v1553 = vand.u32 %v1297, 4294901760
    %v1554 = vsub.f32 %v1297, %v1553
    %v1555 = vand.u32 %v1554, 4294901760
    %v1556 = vsub.f32 %v1554, %v1555
    %v1557 = vand.u32 %v1556, 4294901760
    %1558 = vmatpush1.msra.mxu0 %v1557
    %v1559 = vand.u32 %v1296, 4294901760
    %v1560 = vsub.f32 %v1296, %v1559
    %v1561 = vand.u32 %v1560, 4294901760
    %v1562 = vsub.f32 %v1560, %v1561
    %v1563 = vand.u32 %v1562, 4294901760
    %1564 = vmatprep.subr.mxu0 %v1563
    %v1565 = vand.u32 %v1295, 4294901760
    %v1566 = vsub.f32 %v1295, %v1565
    %v1567 = vand.u32 %v1566, 4294901760
    %v1568 = vsub.f32 %v1566, %v1567
    %v1569 = vand.u32 %v1568, 4294901760
    %1570 = vmatpush1.msra.mxu0 %v1569
    %v1571 = vand.u32 %v1294, 4294901760
    %v1572 = vsub.f32 %v1294, %v1571
    %v1573 = vand.u32 %v1572, 4294901760
    %v1574 = vsub.f32 %v1572, %v1573
    %v1575 = vand.u32 %v1574, 4294901760
    %1576 = vmatprep.subr.mxu0 %v1575
    %v1577 = vand.u32 %v1293, 4294901760
    %v1578 = vsub.f32 %v1293, %v1577
    %v1579 = vand.u32 %v1578, 4294901760
    %v1580 = vsub.f32 %v1578, %v1579
    %v1581 = vand.u32 %v1580, 4294901760
    %1582 = vmatpush1.msra.mxu0 %v1581
    %v1583 = vand.u32 %v1292, 4294901760
    %v1584 = vsub.f32 %v1292, %v1583
    %v1585 = vand.u32 %v1584, 4294901760
    %v1586 = vsub.f32 %v1584, %v1585
    %v1587 = vand.u32 %v1586, 4294901760
    %1588 = vmatprep.subr.mxu0 %v1587
    %v1589 = vand.u32 %v1291, 4294901760
    %v1590 = vsub.f32 %v1291, %v1589
    %v1591 = vand.u32 %v1590, 4294901760
    %v1592 = vsub.f32 %v1590, %v1591
    %v1593 = vand.u32 %v1592, 4294901760
    %1594 = vmatpush1.msra.mxu0 %v1593
    %v1595 = vand.u32 %v1290, 4294901760
    %v1596 = vsub.f32 %v1290, %v1595
    %v1597 = vand.u32 %v1596, 4294901760
    %v1598 = vsub.f32 %v1596, %v1597
    %v1599 = vand.u32 %v1598, 4294901760
    %1600 = vmatprep.subr.mxu0 %v1599
    %v1601 = vand.u32 %v1289, 4294901760
    %v1602 = vsub.f32 %v1289, %v1601
    %v1603 = vand.u32 %v1602, 4294901760
    %v1604 = vsub.f32 %v1602, %v1603
    %v1605 = vand.u32 %v1604, 4294901760
    %1606 = vmatpush1.msra.mxu0 %v1605
    %v1607 = vand.u32 %v1288, 4294901760
    %v1608 = vsub.f32 %v1288, %v1607
    %v1609 = vand.u32 %v1608, 4294901760
    %v1610 = vsub.f32 %v1608, %v1609
    %v1611 = vand.u32 %v1610, 4294901760
    %1612 = vmatprep.subr.mxu0 %v1611
    %v1613 = vand.u32 %v1287, 4294901760
    %v1614 = vsub.f32 %v1287, %v1613
    %v1615 = vand.u32 %v1614, 4294901760
    %v1616 = vsub.f32 %v1614, %v1615
    %v1617 = vand.u32 %v1616, 4294901760
    %1618 = vmatpush1.msra.mxu0 %v1617
    %1619 = vmatprep.subr.mxu0 0.0
    %1620 = vmatpush2.msra.mxu0 0.0
    %1621 = vmatprep.subr.mxu0 0.0
    %1622 = vmatpush2.msra.mxu0 0.0
    %1623 = vmatprep.subr.mxu0 0.0
    %1624 = vmatpush2.msra.mxu0 0.0
    %1625 = vmatprep.subr.mxu0 0.0
    %1626 = vmatpush2.msra.mxu0 0.0
    %1627 = vmatprep.subr.mxu0 0.0
    %1628 = vmatpush2.msra.mxu0 0.0
    %1629 = vmatprep.subr.mxu0 0.0
    %1630 = vmatpush2.msra.mxu0 0.0
    %1631 = vmatprep.subr.mxu0 0.0
    %1632 = vmatpush2.msra.mxu0 0.0
    %1633 = vmatprep.subr.mxu0 0.0
    %1634 = vmatpush2.msra.mxu0 0.0
    %1635 = vmatprep.subr.mxu0 0.0
    %1636 = vmatpush2.msra.mxu0 0.0
    %1637 = vmatprep.subr.mxu0 0.0
    %1638 = vmatpush2.msra.mxu0 0.0
    %1639 = vmatprep.subr.mxu0 0.0
    %1640 = vmatpush2.msra.mxu0 0.0
    %1641 = vmatprep.subr.mxu0 0.0
    %1642 = vmatpush2.msra.mxu0 0.0
    %1643 = vmatprep.subr.mxu0 0.0
    %1644 = vmatpush2.msra.mxu0 0.0
    %1645 = vmatprep.subr.mxu0 0.0
    %1646 = vmatpush2.msra.mxu0 0.0
    %1647 = vmatprep.subr.mxu0 0.0
    %1648 = vmatpush2.msra.mxu0 0.0
    %1649 = vmatprep.subr.mxu0 0.0
    %1650 = vmatpush2.msra.mxu0 0.0
    %1651 = vmatprep.mubr.f32.mxu0 0.0
    %v1652 = vand.u32 %v1286, 4294901760
    %1653 = vmatmul.mubr.f32.gmra.mxu0 %v1652
    %v1654 = vpop.f32.mrf.mxu0
    %v1655 = vadd.f32 %v1423, %v1654
    %v1656 = vpop.f32.mrf.mxu0
    %v1657 = vadd.f32 %v1425, %v1656
    %1658 = vdwg.mxu0
    %v1659 = vand.u32 %v1318, 4294901760
    %v1660 = vsub.f32 %v1318, %v1659
    %1661 = vmatprep.subr.mxu0 %v1660
    %v1662 = vand.u32 %v1317, 4294901760
    %v1663 = vsub.f32 %v1317, %v1662
    %1664 = vmatpush1.msra.mxu0 %v1663
    %v1665 = vand.u32 %v1316, 4294901760
    %v1666 = vsub.f32 %v1316, %v1665
    %1667 = vmatprep.subr.mxu0 %v1666
    %v1668 = vand.u32 %v1315, 4294901760
    %v1669 = vsub.f32 %v1315, %v1668
    %1670 = vmatpush1.msra.mxu0 %v1669
    %v1671 = vand.u32 %v1314, 4294901760
    %v1672 = vsub.f32 %v1314, %v1671
    %1673 = vmatprep.subr.mxu0 %v1672
    %v1674 = vand.u32 %v1313, 4294901760
    %v1675 = vsub.f32 %v1313, %v1674
    %1676 = vmatpush1.msra.mxu0 %v1675
    %v1677 = vand.u32 %v1312, 4294901760
    %v1678 = vsub.f32 %v1312, %v1677
    %1679 = vmatprep.subr.mxu0 %v1678
    %v1680 = vand.u32 %v1311, 4294901760
    %v1681 = vsub.f32 %v1311, %v1680
    %1682 = vmatpush1.msra.mxu0 %v1681
    %v1683 = vand.u32 %v1310, 4294901760
    %v1684 = vsub.f32 %v1310, %v1683
    %1685 = vmatprep.subr.mxu0 %v1684
    %v1686 = vand.u32 %v1309, 4294901760
    %v1687 = vsub.f32 %v1309, %v1686
    %1688 = vmatpush1.msra.mxu0 %v1687
    %v1689 = vand.u32 %v1308, 4294901760
    %v1690 = vsub.f32 %v1308, %v1689
    %1691 = vmatprep.subr.mxu0 %v1690
    %v1692 = vand.u32 %v1307, 4294901760
    %v1693 = vsub.f32 %v1307, %v1692
    %1694 = vmatpush1.msra.mxu0 %v1693
    %v1695 = vand.u32 %v1306, 4294901760
    %v1696 = vsub.f32 %v1306, %v1695
    %1697 = vmatprep.subr.mxu0 %v1696
    %v1698 = vand.u32 %v1305, 4294901760
    %v1699 = vsub.f32 %v1305, %v1698
    %1700 = vmatpush1.msra.mxu0 %v1699
    %v1701 = vand.u32 %v1304, 4294901760
    %v1702 = vsub.f32 %v1304, %v1701
    %1703 = vmatprep.subr.mxu0 %v1702
    %v1704 = vand.u32 %v1303, 4294901760
    %v1705 = vsub.f32 %v1303, %v1704
    %1706 = vmatpush1.msra.mxu0 %v1705
    %v1707 = vand.u32 %v1302, 4294901760
    %v1708 = vsub.f32 %v1302, %v1707
    %1709 = vmatprep.subr.mxu0 %v1708
    %v1710 = vand.u32 %v1301, 4294901760
    %v1711 = vsub.f32 %v1301, %v1710
    %1712 = vmatpush1.msra.mxu0 %v1711
    %v1713 = vand.u32 %v1300, 4294901760
    %v1714 = vsub.f32 %v1300, %v1713
    %1715 = vmatprep.subr.mxu0 %v1714
    %v1716 = vand.u32 %v1299, 4294901760
    %v1717 = vsub.f32 %v1299, %v1716
    %1718 = vmatpush1.msra.mxu0 %v1717
    %v1719 = vand.u32 %v1298, 4294901760
    %v1720 = vsub.f32 %v1298, %v1719
    %1721 = vmatprep.subr.mxu0 %v1720
    %v1722 = vand.u32 %v1297, 4294901760
    %v1723 = vsub.f32 %v1297, %v1722
    %1724 = vmatpush1.msra.mxu0 %v1723
    %v1725 = vand.u32 %v1296, 4294901760
    %v1726 = vsub.f32 %v1296, %v1725
    %1727 = vmatprep.subr.mxu0 %v1726
    %v1728 = vand.u32 %v1295, 4294901760
    %v1729 = vsub.f32 %v1295, %v1728
    %1730 = vmatpush1.msra.mxu0 %v1729
    %v1731 = vand.u32 %v1294, 4294901760
    %v1732 = vsub.f32 %v1294, %v1731
    %1733 = vmatprep.subr.mxu0 %v1732
    %v1734 = vand.u32 %v1293, 4294901760
    %v1735 = vsub.f32 %v1293, %v1734
    %1736 = vmatpush1.msra.mxu0 %v1735
    %v1737 = vand.u32 %v1292, 4294901760
    %v1738 = vsub.f32 %v1292, %v1737
    %1739 = vmatprep.subr.mxu0 %v1738
    %v1740 = vand.u32 %v1291, 4294901760
    %v1741 = vsub.f32 %v1291, %v1740
    %1742 = vmatpush1.msra.mxu0 %v1741
    %v1743 = vand.u32 %v1290, 4294901760
    %v1744 = vsub.f32 %v1290, %v1743
    %1745 = vmatprep.subr.mxu0 %v1744
    %v1746 = vand.u32 %v1289, 4294901760
    %v1747 = vsub.f32 %v1289, %v1746
    %1748 = vmatpush1.msra.mxu0 %v1747
    %v1749 = vand.u32 %v1288, 4294901760
    %v1750 = vsub.f32 %v1288, %v1749
    %1751 = vmatprep.subr.mxu0 %v1750
    %v1752 = vand.u32 %v1287, 4294901760
    %v1753 = vsub.f32 %v1287, %v1752
    %1754 = vmatpush1.msra.mxu0 %v1753
    %1755 = vmatprep.subr.mxu0 0.0
    %1756 = vmatpush2.msra.mxu0 0.0
    %1757 = vmatprep.subr.mxu0 0.0
    %1758 = vmatpush2.msra.mxu0 0.0
    %1759 = vmatprep.subr.mxu0 0.0
    %1760 = vmatpush2.msra.mxu0 0.0
    %1761 = vmatprep.subr.mxu0 0.0
    %1762 = vmatpush2.msra.mxu0 0.0
    %1763 = vmatprep.subr.mxu0 0.0
    %1764 = vmatpush2.msra.mxu0 0.0
    %1765 = vmatprep.subr.mxu0 0.0
    %1766 = vmatpush2.msra.mxu0 0.0
    %1767 = vmatprep.subr.mxu0 0.0
    %1768 = vmatpush2.msra.mxu0 0.0
    %1769 = vmatprep.subr.mxu0 0.0
    %1770 = vmatpush2.msra.mxu0 0.0
    %1771 = vmatprep.subr.mxu0 0.0
    %1772 = vmatpush2.msra.mxu0 0.0
    %1773 = vmatprep.subr.mxu0 0.0
    %1774 = vmatpush2.msra.mxu0 0.0
    %1775 = vmatprep.subr.mxu0 0.0
    %1776 = vmatpush2.msra.mxu0 0.0
    %1777 = vmatprep.subr.mxu0 0.0
    %1778 = vmatpush2.msra.mxu0 0.0
    %1779 = vmatprep.subr.mxu0 0.0
    %1780 = vmatpush2.msra.mxu0 0.0
    %1781 = vmatprep.subr.mxu0 0.0
    %1782 = vmatpush2.msra.mxu0 0.0
    %1783 = vmatprep.subr.mxu0 0.0
    %1784 = vmatpush2.msra.mxu0 0.0
    %1785 = vmatprep.subr.mxu0 0.0
    %1786 = vmatpush2.msra.mxu0 0.0
    %1787 = vmatprep.mubr.f32.mxu0 0.0
    %v1788 = vand.u32 %v1286, 4294901760
    %v1789 = vsub.f32 %v1286, %v1788
    %1790 = vmatmul.mubr.f32.gmra.mxu0 %v1789
    %v1791 = vpop.f32.mrf.mxu0
    %v1792 = vadd.f32 %v1655, %v1791
    %v1793 = vpop.f32.mrf.mxu0
    %v1794 = vadd.f32 %v1657, %v1793
    %1795 = vdwg.mxu0
    %v1796 = vand.u32 %v1318, 4294901760
    %1797 = vmatprep.subr.mxu0 %v1796
    %v1798 = vand.u32 %v1317, 4294901760
    %1799 = vmatpush1.msra.mxu0 %v1798
    %v1800 = vand.u32 %v1316, 4294901760
    %1801 = vmatprep.subr.mxu0 %v1800
    %v1802 = vand.u32 %v1315, 4294901760
    %1803 = vmatpush1.msra.mxu0 %v1802
    %v1804 = vand.u32 %v1314, 4294901760
    %1805 = vmatprep.subr.mxu0 %v1804
    %v1806 = vand.u32 %v1313, 4294901760
    %1807 = vmatpush1.msra.mxu0 %v1806
    %v1808 = vand.u32 %v1312, 4294901760
    %1809 = vmatprep.subr.mxu0 %v1808
    %v1810 = vand.u32 %v1311, 4294901760
    %1811 = vmatpush1.msra.mxu0 %v1810
    %v1812 = vand.u32 %v1310, 4294901760
    %1813 = vmatprep.subr.mxu0 %v1812
    %v1814 = vand.u32 %v1309, 4294901760
    %1815 = vmatpush1.msra.mxu0 %v1814
    %v1816 = vand.u32 %v1308, 4294901760
    %1817 = vmatprep.subr.mxu0 %v1816
    %v1818 = vand.u32 %v1307, 4294901760
    %1819 = vmatpush1.msra.mxu0 %v1818
    %v1820 = vand.u32 %v1306, 4294901760
    %1821 = vmatprep.subr.mxu0 %v1820
    %v1822 = vand.u32 %v1305, 4294901760
    %1823 = vmatpush1.msra.mxu0 %v1822
    %v1824 = vand.u32 %v1304, 4294901760
    %1825 = vmatprep.subr.mxu0 %v1824
    %v1826 = vand.u32 %v1303, 4294901760
    %1827 = vmatpush1.msra.mxu0 %v1826
    %v1828 = vand.u32 %v1302, 4294901760
    %1829 = vmatprep.subr.mxu0 %v1828
    %v1830 = vand.u32 %v1301, 4294901760
    %1831 = vmatpush1.msra.mxu0 %v1830
    %v1832 = vand.u32 %v1300, 4294901760
    %1833 = vmatprep.subr.mxu0 %v1832
    %v1834 = vand.u32 %v1299, 4294901760
    %1835 = vmatpush1.msra.mxu0 %v1834
    %v1836 = vand.u32 %v1298, 4294901760
    %1837 = vmatprep.subr.mxu0 %v1836
    %v1838 = vand.u32 %v1297, 4294901760
    %1839 = vmatpush1.msra.mxu0 %v1838
    %v1840 = vand.u32 %v1296, 4294901760
    %1841 = vmatprep.subr.mxu0 %v1840
    %v1842 = vand.u32 %v1295, 4294901760
    %1843 = vmatpush1.msra.mxu0 %v1842
    %v1844 = vand.u32 %v1294, 4294901760
    %1845 = vmatprep.subr.mxu0 %v1844
    %v1846 = vand.u32 %v1293, 4294901760
    %1847 = vmatpush1.msra.mxu0 %v1846
    %v1848 = vand.u32 %v1292, 4294901760
    %1849 = vmatprep.subr.mxu0 %v1848
    %v1850 = vand.u32 %v1291, 4294901760
    %1851 = vmatpush1.msra.mxu0 %v1850
    %v1852 = vand.u32 %v1290, 4294901760
    %1853 = vmatprep.subr.mxu0 %v1852
    %v1854 = vand.u32 %v1289, 4294901760
    %1855 = vmatpush1.msra.mxu0 %v1854
    %v1856 = vand.u32 %v1288, 4294901760
    %1857 = vmatprep.subr.mxu0 %v1856
    %v1858 = vand.u32 %v1287, 4294901760
    %1859 = vmatpush1.msra.mxu0 %v1858
    %1860 = vmatprep.subr.mxu0 0.0
    %1861 = vmatpush2.msra.mxu0 0.0
    %1862 = vmatprep.subr.mxu0 0.0
    %1863 = vmatpush2.msra.mxu0 0.0
    %1864 = vmatprep.subr.mxu0 0.0
    %1865 = vmatpush2.msra.mxu0 0.0
    %1866 = vmatprep.subr.mxu0 0.0
    %1867 = vmatpush2.msra.mxu0 0.0
    %1868 = vmatprep.subr.mxu0 0.0
    %1869 = vmatpush2.msra.mxu0 0.0
    %1870 = vmatprep.subr.mxu0 0.0
    %1871 = vmatpush2.msra.mxu0 0.0
    %1872 = vmatprep.subr.mxu0 0.0
    %1873 = vmatpush2.msra.mxu0 0.0
    %1874 = vmatprep.subr.mxu0 0.0
    %1875 = vmatpush2.msra.mxu0 0.0
    %1876 = vmatprep.subr.mxu0 0.0
    %1877 = vmatpush2.msra.mxu0 0.0
    %1878 = vmatprep.subr.mxu0 0.0
    %1879 = vmatpush2.msra.mxu0 0.0
    %1880 = vmatprep.subr.mxu0 0.0
    %1881 = vmatpush2.msra.mxu0 0.0
    %1882 = vmatprep.subr.mxu0 0.0
    %1883 = vmatpush2.msra.mxu0 0.0
    %1884 = vmatprep.subr.mxu0 0.0
    %1885 = vmatpush2.msra.mxu0 0.0
    %1886 = vmatprep.subr.mxu0 0.0
    %1887 = vmatpush2.msra.mxu0 0.0
    %1888 = vmatprep.subr.mxu0 0.0
    %1889 = vmatpush2.msra.mxu0 0.0
    %1890 = vmatprep.subr.mxu0 0.0
    %1891 = vmatpush2.msra.mxu0 0.0
    %1892 = vmatprep.mubr.f32.mxu0 0.0
    %v1893 = vand.u32 %v1286, 4294901760
    %v1894 = vsub.f32 %v1286, %v1893
    %v1895 = vand.u32 %v1894, 4294901760
    %1896 = vmatmul.mubr.f32.gmra.mxu0 %v1895
    %v1897 = vpop.f32.mrf.mxu0
    %v1898 = vadd.f32 %v1792, %v1897
    %v1899 = vpop.f32.mrf.mxu0
    %v1900 = vadd.f32 %v1794, %v1899
    %1901 = vdwg.mxu0
    %v1902 = vand.u32 %v1318, 4294901760
    %v1903 = vsub.f32 %v1318, %v1902
    %v1904 = vand.u32 %v1903, 4294901760
    %1905 = vmatprep.subr.mxu0 %v1904
    %v1906 = vand.u32 %v1317, 4294901760
    %v1907 = vsub.f32 %v1317, %v1906
    %v1908 = vand.u32 %v1907, 4294901760
    %1909 = vmatpush1.msra.mxu0 %v1908
    %v1910 = vand.u32 %v1316, 4294901760
    %v1911 = vsub.f32 %v1316, %v1910
    %v1912 = vand.u32 %v1911, 4294901760
    %1913 = vmatprep.subr.mxu0 %v1912
    %v1914 = vand.u32 %v1315, 4294901760
    %v1915 = vsub.f32 %v1315, %v1914
    %v1916 = vand.u32 %v1915, 4294901760
    %1917 = vmatpush1.msra.mxu0 %v1916
    %v1918 = vand.u32 %v1314, 4294901760
    %v1919 = vsub.f32 %v1314, %v1918
    %v1920 = vand.u32 %v1919, 4294901760
    %1921 = vmatprep.subr.mxu0 %v1920
    %v1922 = vand.u32 %v1313, 4294901760
    %v1923 = vsub.f32 %v1313, %v1922
    %v1924 = vand.u32 %v1923, 4294901760
    %1925 = vmatpush1.msra.mxu0 %v1924
    %v1926 = vand.u32 %v1312, 4294901760
    %v1927 = vsub.f32 %v1312, %v1926
    %v1928 = vand.u32 %v1927, 4294901760
    %1929 = vmatprep.subr.mxu0 %v1928
    %v1930 = vand.u32 %v1311, 4294901760
    %v1931 = vsub.f32 %v1311, %v1930
    %v1932 = vand.u32 %v1931, 4294901760
    %1933 = vmatpush1.msra.mxu0 %v1932
    %v1934 = vand.u32 %v1310, 4294901760
    %v1935 = vsub.f32 %v1310, %v1934
    %v1936 = vand.u32 %v1935, 4294901760
    %1937 = vmatprep.subr.mxu0 %v1936
    %v1938 = vand.u32 %v1309, 4294901760
    %v1939 = vsub.f32 %v1309, %v1938
    %v1940 = vand.u32 %v1939, 4294901760
    %1941 = vmatpush1.msra.mxu0 %v1940
    %v1942 = vand.u32 %v1308, 4294901760
    %v1943 = vsub.f32 %v1308, %v1942
    %v1944 = vand.u32 %v1943, 4294901760
    %1945 = vmatprep.subr.mxu0 %v1944
    %v1946 = vand.u32 %v1307, 4294901760
    %v1947 = vsub.f32 %v1307, %v1946
    %v1948 = vand.u32 %v1947, 4294901760
    %1949 = vmatpush1.msra.mxu0 %v1948
    %v1950 = vand.u32 %v1306, 4294901760
    %v1951 = vsub.f32 %v1306, %v1950
    %v1952 = vand.u32 %v1951, 4294901760
    %1953 = vmatprep.subr.mxu0 %v1952
    %v1954 = vand.u32 %v1305, 4294901760
    %v1955 = vsub.f32 %v1305, %v1954
    %v1956 = vand.u32 %v1955, 4294901760
    %1957 = vmatpush1.msra.mxu0 %v1956
    %v1958 = vand.u32 %v1304, 4294901760
    %v1959 = vsub.f32 %v1304, %v1958
    %v1960 = vand.u32 %v1959, 4294901760
    %1961 = vmatprep.subr.mxu0 %v1960
    %v1962 = vand.u32 %v1303, 4294901760
    %v1963 = vsub.f32 %v1303, %v1962
    %v1964 = vand.u32 %v1963, 4294901760
    %1965 = vmatpush1.msra.mxu0 %v1964
    %v1966 = vand.u32 %v1302, 4294901760
    %v1967 = vsub.f32 %v1302, %v1966
    %v1968 = vand.u32 %v1967, 4294901760
    %1969 = vmatprep.subr.mxu0 %v1968
    %v1970 = vand.u32 %v1301, 4294901760
    %v1971 = vsub.f32 %v1301, %v1970
    %v1972 = vand.u32 %v1971, 4294901760
    %1973 = vmatpush1.msra.mxu0 %v1972
    %v1974 = vand.u32 %v1300, 4294901760
    %v1975 = vsub.f32 %v1300, %v1974
    %v1976 = vand.u32 %v1975, 4294901760
    %1977 = vmatprep.subr.mxu0 %v1976
    %v1978 = vand.u32 %v1299, 4294901760
    %v1979 = vsub.f32 %v1299, %v1978
    %v1980 = vand.u32 %v1979, 4294901760
    %1981 = vmatpush1.msra.mxu0 %v1980
    %v1982 = vand.u32 %v1298, 4294901760
    %v1983 = vsub.f32 %v1298, %v1982
    %v1984 = vand.u32 %v1983, 4294901760
    %1985 = vmatprep.subr.mxu0 %v1984
    %v1986 = vand.u32 %v1297, 4294901760
    %v1987 = vsub.f32 %v1297, %v1986
    %v1988 = vand.u32 %v1987, 4294901760
    %1989 = vmatpush1.msra.mxu0 %v1988
    %v1990 = vand.u32 %v1296, 4294901760
    %v1991 = vsub.f32 %v1296, %v1990
    %v1992 = vand.u32 %v1991, 4294901760
    %1993 = vmatprep.subr.mxu0 %v1992
    %v1994 = vand.u32 %v1295, 4294901760
    %v1995 = vsub.f32 %v1295, %v1994
    %v1996 = vand.u32 %v1995, 4294901760
    %1997 = vmatpush1.msra.mxu0 %v1996
    %v1998 = vand.u32 %v1294, 4294901760
    %v1999 = vsub.f32 %v1294, %v1998
    %v2000 = vand.u32 %v1999, 4294901760
    %2001 = vmatprep.subr.mxu0 %v2000
    %v2002 = vand.u32 %v1293, 4294901760
    %v2003 = vsub.f32 %v1293, %v2002
    %v2004 = vand.u32 %v2003, 4294901760
    %2005 = vmatpush1.msra.mxu0 %v2004
    %v2006 = vand.u32 %v1292, 4294901760
    %v2007 = vsub.f32 %v1292, %v2006
    %v2008 = vand.u32 %v2007, 4294901760
    %2009 = vmatprep.subr.mxu0 %v2008
    %v2010 = vand.u32 %v1291, 4294901760
    %v2011 = vsub.f32 %v1291, %v2010
    %v2012 = vand.u32 %v2011, 4294901760
    %2013 = vmatpush1.msra.mxu0 %v2012
    %v2014 = vand.u32 %v1290, 4294901760
    %v2015 = vsub.f32 %v1290, %v2014
    %v2016 = vand.u32 %v2015, 4294901760
    %2017 = vmatprep.subr.mxu0 %v2016
    %v2018 = vand.u32 %v1289, 4294901760
    %v2019 = vsub.f32 %v1289, %v2018
    %v2020 = vand.u32 %v2019, 4294901760
    %2021 = vmatpush1.msra.mxu0 %v2020
    %v2022 = vand.u32 %v1288, 4294901760
    %v2023 = vsub.f32 %v1288, %v2022
    %v2024 = vand.u32 %v2023, 4294901760
    %2025 = vmatprep.subr.mxu0 %v2024
    %v2026 = vand.u32 %v1287, 4294901760
    %v2027 = vsub.f32 %v1287, %v2026
    %v2028 = vand.u32 %v2027, 4294901760
    %2029 = vmatpush1.msra.mxu0 %v2028
    %2030 = vmatprep.subr.mxu0 0.0
    %2031 = vmatpush2.msra.mxu0 0.0
    %2032 = vmatprep.subr.mxu0 0.0
    %2033 = vmatpush2.msra.mxu0 0.0
    %2034 = vmatprep.subr.mxu0 0.0
    %2035 = vmatpush2.msra.mxu0 0.0
    %2036 = vmatprep.subr.mxu0 0.0
    %2037 = vmatpush2.msra.mxu0 0.0
    %2038 = vmatprep.subr.mxu0 0.0
    %2039 = vmatpush2.msra.mxu0 0.0
    %2040 = vmatprep.subr.mxu0 0.0
    %2041 = vmatpush2.msra.mxu0 0.0
    %2042 = vmatprep.subr.mxu0 0.0
    %2043 = vmatpush2.msra.mxu0 0.0
    %2044 = vmatprep.subr.mxu0 0.0
    %2045 = vmatpush2.msra.mxu0 0.0
    %2046 = vmatprep.subr.mxu0 0.0
    %2047 = vmatpush2.msra.mxu0 0.0
    %2048 = vmatprep.subr.mxu0 0.0
    %2049 = vmatpush2.msra.mxu0 0.0
    %2050 = vmatprep.subr.mxu0 0.0
    %2051 = vmatpush2.msra.mxu0 0.0
    %2052 = vmatprep.subr.mxu0 0.0
    %2053 = vmatpush2.msra.mxu0 0.0
    %2054 = vmatprep.subr.mxu0 0.0
    %2055 = vmatpush2.msra.mxu0 0.0
    %2056 = vmatprep.subr.mxu0 0.0
    %2057 = vmatpush2.msra.mxu0 0.0
    %2058 = vmatprep.subr.mxu0 0.0
    %2059 = vmatpush2.msra.mxu0 0.0
    %2060 = vmatprep.subr.mxu0 0.0
    %2061 = vmatpush2.msra.mxu0 0.0
    %2062 = vmatprep.mubr.f32.mxu0 0.0
    %v2063 = vand.u32 %v1286, 4294901760
    %2064 = vmatmul.mubr.f32.gmra.mxu0 %v2063
    %v2065 = vpop.f32.mrf.mxu0
    %v2066 = vadd.f32 %v1898, %v2065
    %v2067 = vpop.f32.mrf.mxu0
    %v2068 = vadd.f32 %v1900, %v2067
    %2069 = vdwg.mxu0
    %v2070 = vand.u32 %v1318, 4294901760
    %2071 = vmatprep.subr.mxu0 %v2070
    %v2072 = vand.u32 %v1317, 4294901760
    %2073 = vmatpush1.msra.mxu0 %v2072
    %v2074 = vand.u32 %v1316, 4294901760
    %2075 = vmatprep.subr.mxu0 %v2074
    %v2076 = vand.u32 %v1315, 4294901760
    %2077 = vmatpush1.msra.mxu0 %v2076
    %v2078 = vand.u32 %v1314, 4294901760
    %2079 = vmatprep.subr.mxu0 %v2078
    %v2080 = vand.u32 %v1313, 4294901760
    %2081 = vmatpush1.msra.mxu0 %v2080
    %v2082 = vand.u32 %v1312, 4294901760
    %2083 = vmatprep.subr.mxu0 %v2082
    %v2084 = vand.u32 %v1311, 4294901760
    %2085 = vmatpush1.msra.mxu0 %v2084
    %v2086 = vand.u32 %v1310, 4294901760
    %2087 = vmatprep.subr.mxu0 %v2086
    %v2088 = vand.u32 %v1309, 4294901760
    %2089 = vmatpush1.msra.mxu0 %v2088
    %v2090 = vand.u32 %v1308, 4294901760
    %2091 = vmatprep.subr.mxu0 %v2090
    %v2092 = vand.u32 %v1307, 4294901760
    %2093 = vmatpush1.msra.mxu0 %v2092
    %v2094 = vand.u32 %v1306, 4294901760
    %2095 = vmatprep.subr.mxu0 %v2094
    %v2096 = vand.u32 %v1305, 4294901760
    %2097 = vmatpush1.msra.mxu0 %v2096
    %v2098 = vand.u32 %v1304, 4294901760
    %2099 = vmatprep.subr.mxu0 %v2098
    %v2100 = vand.u32 %v1303, 4294901760
    %2101 = vmatpush1.msra.mxu0 %v2100
    %v2102 = vand.u32 %v1302, 4294901760
    %2103 = vmatprep.subr.mxu0 %v2102
    %v2104 = vand.u32 %v1301, 4294901760
    %2105 = vmatpush1.msra.mxu0 %v2104
    %v2106 = vand.u32 %v1300, 4294901760
    %2107 = vmatprep.subr.mxu0 %v2106
    %v2108 = vand.u32 %v1299, 4294901760
    %2109 = vmatpush1.msra.mxu0 %v2108
    %v2110 = vand.u32 %v1298, 4294901760
    %2111 = vmatprep.subr.mxu0 %v2110
    %v2112 = vand.u32 %v1297, 4294901760
    %2113 = vmatpush1.msra.mxu0 %v2112
    %v2114 = vand.u32 %v1296, 4294901760
    %2115 = vmatprep.subr.mxu0 %v2114
    %v2116 = vand.u32 %v1295, 4294901760
    %2117 = vmatpush1.msra.mxu0 %v2116
    %v2118 = vand.u32 %v1294, 4294901760
    %2119 = vmatprep.subr.mxu0 %v2118
    %v2120 = vand.u32 %v1293, 4294901760
    %2121 = vmatpush1.msra.mxu0 %v2120
    %v2122 = vand.u32 %v1292, 4294901760
    %2123 = vmatprep.subr.mxu0 %v2122
    %v2124 = vand.u32 %v1291, 4294901760
    %2125 = vmatpush1.msra.mxu0 %v2124
    %v2126 = vand.u32 %v1290, 4294901760
    %2127 = vmatprep.subr.mxu0 %v2126
    %v2128 = vand.u32 %v1289, 4294901760
    %2129 = vmatpush1.msra.mxu0 %v2128
    %v2130 = vand.u32 %v1288, 4294901760
    %2131 = vmatprep.subr.mxu0 %v2130
    %v2132 = vand.u32 %v1287, 4294901760
    %2133 = vmatpush1.msra.mxu0 %v2132
    %2134 = vmatprep.subr.mxu0 0.0
    %2135 = vmatpush2.msra.mxu0 0.0
    %2136 = vmatprep.subr.mxu0 0.0
    %2137 = vmatpush2.msra.mxu0 0.0
    %2138 = vmatprep.subr.mxu0 0.0
    %2139 = vmatpush2.msra.mxu0 0.0
    %2140 = vmatprep.subr.mxu0 0.0
    %2141 = vmatpush2.msra.mxu0 0.0
    %2142 = vmatprep.subr.mxu0 0.0
    %2143 = vmatpush2.msra.mxu0 0.0
    %2144 = vmatprep.subr.mxu0 0.0
    %2145 = vmatpush2.msra.mxu0 0.0
    %2146 = vmatprep.subr.mxu0 0.0
    %2147 = vmatpush2.msra.mxu0 0.0
    %2148 = vmatprep.subr.mxu0 0.0
    %2149 = vmatpush2.msra.mxu0 0.0
    %2150 = vmatprep.subr.mxu0 0.0
    %2151 = vmatpush2.msra.mxu0 0.0
    %2152 = vmatprep.subr.mxu0 0.0
    %2153 = vmatpush2.msra.mxu0 0.0
    %2154 = vmatprep.subr.mxu0 0.0
    %2155 = vmatpush2.msra.mxu0 0.0
    %2156 = vmatprep.subr.mxu0 0.0
    %2157 = vmatpush2.msra.mxu0 0.0
    %2158 = vmatprep.subr.mxu0 0.0
    %2159 = vmatpush2.msra.mxu0 0.0
    %2160 = vmatprep.subr.mxu0 0.0
    %2161 = vmatpush2.msra.mxu0 0.0
    %2162 = vmatprep.subr.mxu0 0.0
    %2163 = vmatpush2.msra.mxu0 0.0
    %2164 = vmatprep.subr.mxu0 0.0
    %2165 = vmatpush2.msra.mxu0 0.0
    %2166 = vmatprep.mubr.f32.mxu0 0.0
    %v2167 = vand.u32 %v1286, 4294901760
    %2168 = vmatmul.mubr.f32.gmra.mxu0 %v2167
    %v2169 = vpop.f32.mrf.mxu0
    %v2170 = vadd.f32 %v2066, %v2169
    %v2171 = vpop.f32.mrf.mxu0
    %v2172 = vadd.f32 %v2068, %v2171
    %2173 = vdwg.mxu0
    %v2174 = vld [vmem:[#allocation11] sm:$0xff]
    %v2175 = vld [vmem:[#allocation11 + $0x8] sm:$0xff]
    %v2176 = vld [vmem:[#allocation11 + $0x10] sm:$0xff]
    %v2177 = vld [vmem:[#allocation11 + $0x18] sm:$0xff]
    %v2178 = vld [vmem:[#allocation11 + $0x20] sm:$0xff]
    %v2179 = vld [vmem:[#allocation11 + $0x28] sm:$0xff]
    %v2180 = vld [vmem:[#allocation11 + $0x30] sm:$0xff]
    %v2181 = vld [vmem:[#allocation11 + $0x38] sm:$0xff]
    %v2182 = vld [vmem:[#allocation11 + $0x40] sm:$0xff]
    %v2183 = vld [vmem:[#allocation11 + $0x48] sm:$0xff]
    %2184 = vmatprep.subr.mxu0 0.0
    %2185 = vmatpush1.msra.mxu0 0.0
    %2186 = vmatprep.subr.mxu0 0.0
    %2187 = vmatpush1.msra.mxu0 0.0
    %2188 = vmatprep.subr.mxu0 0.0
    %2189 = vmatpush1.msra.mxu0 0.0
    %2190 = vmatprep.subr.mxu0 0.0
    %2191 = vmatpush1.msra.mxu0 0.0
    %2192 = vmatprep.subr.mxu0 0.0
    %2193 = vmatpush1.msra.mxu0 0.0
    %2194 = vmatprep.subr.mxu0 0.0
    %2195 = vmatpush1.msra.mxu0 0.0
    %2196 = vmatprep.subr.mxu0 0.0
    %2197 = vmatpush1.msra.mxu0 0.0
    %2198 = vmatprep.subr.mxu0 0.0
    %2199 = vmatpush1.msra.mxu0 0.0
    %2200 = vmatprep.subr.mxu0 0.0
    %2201 = vmatpush1.msra.mxu0 0.0
    %2202 = vmatprep.subr.mxu0 0.0
    %2203 = vmatpush1.msra.mxu0 0.0
    %2204 = vmatprep.subr.mxu0 0.0
    %2205 = vmatpush1.msra.mxu0 0.0
    %v2206 = vand.u32 %v2183, 4294901760
    %2207 = vmatprep.subr.mxu0 %v2206
    %v2208 = vand.u32 %v2182, 4294901760
    %2209 = vmatpush1.msra.mxu0 %v2208
    %v2210 = vand.u32 %v2181, 4294901760
    %2211 = vmatprep.subr.mxu0 %v2210
    %v2212 = vand.u32 %v2180, 4294901760
    %2213 = vmatpush1.msra.mxu0 %v2212
    %v2214 = vand.u32 %v2179, 4294901760
    %2215 = vmatprep.subr.mxu0 %v2214
    %v2216 = vand.u32 %v2178, 4294901760
    %2217 = vmatpush1.msra.mxu0 %v2216
    %v2218 = vand.u32 %v2177, 4294901760
    %2219 = vmatprep.subr.mxu0 %v2218
    %v2220 = vand.u32 %v2176, 4294901760
    %2221 = vmatpush1.msra.mxu0 %v2220
    %v2222 = vand.u32 %v2175, 4294901760
    %2223 = vmatprep.subr.mxu0 %v2222
    %v2224 = vand.u32 %v2174, 4294901760
    %2225 = vmatpush1.msra.mxu0 %v2224
    %2226 = vmatprep.subr.mxu0 0.0
    %2227 = vmatpush2.msra.mxu0 0.0
    %2228 = vmatprep.subr.mxu0 0.0
    %2229 = vmatpush2.msra.mxu0 0.0
    %2230 = vmatprep.subr.mxu0 0.0
    %2231 = vmatpush2.msra.mxu0 0.0
    %2232 = vmatprep.subr.mxu0 0.0
    %2233 = vmatpush2.msra.mxu0 0.0
    %2234 = vmatprep.subr.mxu0 0.0
    %2235 = vmatpush2.msra.mxu0 0.0
    %2236 = vmatprep.subr.mxu0 0.0
    %2237 = vmatpush2.msra.mxu0 0.0
    %2238 = vmatprep.subr.mxu0 0.0
    %2239 = vmatpush2.msra.mxu0 0.0
    %2240 = vmatprep.subr.mxu0 0.0
    %2241 = vmatpush2.msra.mxu0 0.0
    %2242 = vmatprep.subr.mxu0 0.0
    %2243 = vmatpush2.msra.mxu0 0.0
    %2244 = vmatprep.subr.mxu0 0.0
    %2245 = vmatpush2.msra.mxu0 0.0
    %2246 = vmatprep.subr.mxu0 0.0
    %2247 = vmatpush2.msra.mxu0 0.0
    %2248 = vmatprep.subr.mxu0 0.0
    %2249 = vmatpush2.msra.mxu0 0.0
    %2250 = vmatprep.subr.mxu0 0.0
    %2251 = vmatpush2.msra.mxu0 0.0
    %2252 = vmatprep.subr.mxu0 0.0
    %2253 = vmatpush2.msra.mxu0 0.0
    %2254 = vmatprep.subr.mxu0 0.0
    %2255 = vmatpush2.msra.mxu0 0.0
    %2256 = vmatprep.subr.mxu0 0.0
    %2257 = vmatpush2.msra.mxu0 0.0
    %2258 = vmatprep.mubr.f32.mxu0 0.0
    %v2259 = vand.u32 %v107, 4294901760
    %v2260 = vsub.f32 %v107, %v2259
    %v2261 = vand.u32 %v2260, 4294901760
    %v2262 = vsub.f32 %v2260, %v2261
    %v2263 = vand.u32 %v2262, 4294901760
    %2264 = vmatmul.mubr.f32.gmra.mxu0 %v2263
    %v2265 = vpop.f32.mrf.mxu0
    %v2266 = vadd.f32 0.0, %v2265
    %v2267 = vpop.f32.mrf.mxu0
    %v2268 = vadd.f32 0.0, %v2267
    %2269 = vdwg.mxu0
    %2270 = vmatprep.subr.mxu0 0.0
    %2271 = vmatpush1.msra.mxu0 0.0
    %2272 = vmatprep.subr.mxu0 0.0
    %2273 = vmatpush1.msra.mxu0 0.0
    %2274 = vmatprep.subr.mxu0 0.0
    %2275 = vmatpush1.msra.mxu0 0.0
    %2276 = vmatprep.subr.mxu0 0.0
    %2277 = vmatpush1.msra.mxu0 0.0
    %2278 = vmatprep.subr.mxu0 0.0
    %2279 = vmatpush1.msra.mxu0 0.0
    %2280 = vmatprep.subr.mxu0 0.0
    %2281 = vmatpush1.msra.mxu0 0.0
    %2282 = vmatprep.subr.mxu0 0.0
    %2283 = vmatpush1.msra.mxu0 0.0
    %2284 = vmatprep.subr.mxu0 0.0
    %2285 = vmatpush1.msra.mxu0 0.0
    %2286 = vmatprep.subr.mxu0 0.0
    %2287 = vmatpush1.msra.mxu0 0.0
    %2288 = vmatprep.subr.mxu0 0.0
    %2289 = vmatpush1.msra.mxu0 0.0
    %2290 = vmatprep.subr.mxu0 0.0
    %2291 = vmatpush1.msra.mxu0 0.0
    %v2292 = vand.u32 %v2183, 4294901760
    %v2293 = vsub.f32 %v2183, %v2292
    %v2294 = vand.u32 %v2293, 4294901760
    %v2295 = vsub.f32 %v2293, %v2294
    %v2296 = vand.u32 %v2295, 4294901760
    %2297 = vmatprep.subr.mxu0 %v2296
    %v2298 = vand.u32 %v2182, 4294901760
    %v2299 = vsub.f32 %v2182, %v2298
    %v2300 = vand.u32 %v2299, 4294901760
    %v2301 = vsub.f32 %v2299, %v2300
    %v2302 = vand.u32 %v2301, 4294901760
    %2303 = vmatpush1.msra.mxu0 %v2302
    %v2304 = vand.u32 %v2181, 4294901760
    %v2305 = vsub.f32 %v2181, %v2304
    %v2306 = vand.u32 %v2305, 4294901760
    %v2307 = vsub.f32 %v2305, %v2306
    %v2308 = vand.u32 %v2307, 4294901760
    %2309 = vmatprep.subr.mxu0 %v2308
    %v2310 = vand.u32 %v2180, 4294901760
    %v2311 = vsub.f32 %v2180, %v2310
    %v2312 = vand.u32 %v2311, 4294901760
    %v2313 = vsub.f32 %v2311, %v2312
    %v2314 = vand.u32 %v2313, 4294901760
    %2315 = vmatpush1.msra.mxu0 %v2314
    %v2316 = vand.u32 %v2179, 4294901760
    %v2317 = vsub.f32 %v2179, %v2316
    %v2318 = vand.u32 %v2317, 4294901760
    %v2319 = vsub.f32 %v2317, %v2318
    %v2320 = vand.u32 %v2319, 4294901760
    %2321 = vmatprep.subr.mxu0 %v2320
    %v2322 = vand.u32 %v2178, 4294901760
    %v2323 = vsub.f32 %v2178, %v2322
    %v2324 = vand.u32 %v2323, 4294901760
    %v2325 = vsub.f32 %v2323, %v2324
    %v2326 = vand.u32 %v2325, 4294901760
    %2327 = vmatpush1.msra.mxu0 %v2326
    %v2328 = vand.u32 %v2177, 4294901760
    %v2329 = vsub.f32 %v2177, %v2328
    %v2330 = vand.u32 %v2329, 4294901760
    %v2331 = vsub.f32 %v2329, %v2330
    %v2332 = vand.u32 %v2331, 4294901760
    %2333 = vmatprep.subr.mxu0 %v2332
    %v2334 = vand.u32 %v2176, 4294901760
    %v2335 = vsub.f32 %v2176, %v2334
    %v2336 = vand.u32 %v2335, 4294901760
    %v2337 = vsub.f32 %v2335, %v2336
    %v2338 = vand.u32 %v2337, 4294901760
    %2339 = vmatpush1.msra.mxu0 %v2338
    %v2340 = vand.u32 %v2175, 4294901760
    %v2341 = vsub.f32 %v2175, %v2340
    %v2342 = vand.u32 %v2341, 4294901760
    %v2343 = vsub.f32 %v2341, %v2342
    %v2344 = vand.u32 %v2343, 4294901760
    %2345 = vmatprep.subr.mxu0 %v2344
    %v2346 = vand.u32 %v2174, 4294901760
    %v2347 = vsub.f32 %v2174, %v2346
    %v2348 = vand.u32 %v2347, 4294901760
    %v2349 = vsub.f32 %v2347, %v2348
    %v2350 = vand.u32 %v2349, 4294901760
    %2351 = vmatpush1.msra.mxu0 %v2350
    %2352 = vmatprep.subr.mxu0 0.0
    %2353 = vmatpush2.msra.mxu0 0.0
    %2354 = vmatprep.subr.mxu0 0.0
    %2355 = vmatpush2.msra.mxu0 0.0
    %2356 = vmatprep.subr.mxu0 0.0
    %2357 = vmatpush2.msra.mxu0 0.0
    %2358 = vmatprep.subr.mxu0 0.0
    %2359 = vmatpush2.msra.mxu0 0.0
    %2360 = vmatprep.subr.mxu0 0.0
    %2361 = vmatpush2.msra.mxu0 0.0
    %2362 = vmatprep.subr.mxu0 0.0
    %2363 = vmatpush2.msra.mxu0 0.0
    %2364 = vmatprep.subr.mxu0 0.0
    %2365 = vmatpush2.msra.mxu0 0.0
    %2366 = vmatprep.subr.mxu0 0.0
    %2367 = vmatpush2.msra.mxu0 0.0
    %2368 = vmatprep.subr.mxu0 0.0
    %2369 = vmatpush2.msra.mxu0 0.0
    %2370 = vmatprep.subr.mxu0 0.0
    %2371 = vmatpush2.msra.mxu0 0.0
    %2372 = vmatprep.subr.mxu0 0.0
    %2373 = vmatpush2.msra.mxu0 0.0
    %2374 = vmatprep.subr.mxu0 0.0
    %2375 = vmatpush2.msra.mxu0 0.0
    %2376 = vmatprep.subr.mxu0 0.0
    %2377 = vmatpush2.msra.mxu0 0.0
    %2378 = vmatprep.subr.mxu0 0.0
    %2379 = vmatpush2.msra.mxu0 0.0
    %2380 = vmatprep.subr.mxu0 0.0
    %2381 = vmatpush2.msra.mxu0 0.0
    %2382 = vmatprep.subr.mxu0 0.0
    %2383 = vmatpush2.msra.mxu0 0.0
    %2384 = vmatprep.mubr.f32.mxu0 0.0
    %v2385 = vand.u32 %v107, 4294901760
    %2386 = vmatmul.mubr.f32.gmra.mxu0 %v2385
    %v2387 = vpop.f32.mrf.mxu0
    %v2388 = vadd.f32 %v2266, %v2387
    %v2389 = vpop.f32.mrf.mxu0
    %v2390 = vadd.f32 %v2268, %v2389
    %2391 = vdwg.mxu0
    %2392 = vmatprep.subr.mxu0 0.0
    %2393 = vmatpush1.msra.mxu0 0.0
    %2394 = vmatprep.subr.mxu0 0.0
    %2395 = vmatpush1.msra.mxu0 0.0
    %2396 = vmatprep.subr.mxu0 0.0
    %2397 = vmatpush1.msra.mxu0 0.0
    %2398 = vmatprep.subr.mxu0 0.0
    %2399 = vmatpush1.msra.mxu0 0.0
    %2400 = vmatprep.subr.mxu0 0.0
    %2401 = vmatpush1.msra.mxu0 0.0
    %2402 = vmatprep.subr.mxu0 0.0
    %2403 = vmatpush1.msra.mxu0 0.0
    %2404 = vmatprep.subr.mxu0 0.0
    %2405 = vmatpush1.msra.mxu0 0.0
    %2406 = vmatprep.subr.mxu0 0.0
    %2407 = vmatpush1.msra.mxu0 0.0
    %2408 = vmatprep.subr.mxu0 0.0
    %2409 = vmatpush1.msra.mxu0 0.0
    %2410 = vmatprep.subr.mxu0 0.0
    %2411 = vmatpush1.msra.mxu0 0.0
    %2412 = vmatprep.subr.mxu0 0.0
    %2413 = vmatpush1.msra.mxu0 0.0
    %v2414 = vand.u32 %v2183, 4294901760
    %v2415 = vsub.f32 %v2183, %v2414
    %2416 = vmatprep.subr.mxu0 %v2415
    %v2417 = vand.u32 %v2182, 4294901760
    %v2418 = vsub.f32 %v2182, %v2417
    %2419 = vmatpush1.msra.mxu0 %v2418
    %v2420 = vand.u32 %v2181, 4294901760
    %v2421 = vsub.f32 %v2181, %v2420
    %2422 = vmatprep.subr.mxu0 %v2421
    %v2423 = vand.u32 %v2180, 4294901760
    %v2424 = vsub.f32 %v2180, %v2423
    %2425 = vmatpush1.msra.mxu0 %v2424
    %v2426 = vand.u32 %v2179, 4294901760
    %v2427 = vsub.f32 %v2179, %v2426
    %2428 = vmatprep.subr.mxu0 %v2427
    %v2429 = vand.u32 %v2178, 4294901760
    %v2430 = vsub.f32 %v2178, %v2429
    %2431 = vmatpush1.msra.mxu0 %v2430
    %v2432 = vand.u32 %v2177, 4294901760
    %v2433 = vsub.f32 %v2177, %v2432
    %2434 = vmatprep.subr.mxu0 %v2433
    %v2435 = vand.u32 %v2176, 4294901760
    %v2436 = vsub.f32 %v2176, %v2435
    %2437 = vmatpush1.msra.mxu0 %v2436
    %v2438 = vand.u32 %v2175, 4294901760
    %v2439 = vsub.f32 %v2175, %v2438
    %2440 = vmatprep.subr.mxu0 %v2439
    %v2441 = vand.u32 %v2174, 4294901760
    %v2442 = vsub.f32 %v2174, %v2441
    %2443 = vmatpush1.msra.mxu0 %v2442
    %2444 = vmatprep.subr.mxu0 0.0
    %2445 = vmatpush2.msra.mxu0 0.0
    %2446 = vmatprep.subr.mxu0 0.0
    %2447 = vmatpush2.msra.mxu0 0.0
    %2448 = vmatprep.subr.mxu0 0.0
    %2449 = vmatpush2.msra.mxu0 0.0
    %2450 = vmatprep.subr.mxu0 0.0
    %2451 = vmatpush2.msra.mxu0 0.0
    %2452 = vmatprep.subr.mxu0 0.0
    %2453 = vmatpush2.msra.mxu0 0.0
    %2454 = vmatprep.subr.mxu0 0.0
    %2455 = vmatpush2.msra.mxu0 0.0
    %2456 = vmatprep.subr.mxu0 0.0
    %2457 = vmatpush2.msra.mxu0 0.0
    %2458 = vmatprep.subr.mxu0 0.0
    %2459 = vmatpush2.msra.mxu0 0.0
    %2460 = vmatprep.subr.mxu0 0.0
    %2461 = vmatpush2.msra.mxu0 0.0
    %2462 = vmatprep.subr.mxu0 0.0
    %2463 = vmatpush2.msra.mxu0 0.0
    %2464 = vmatprep.subr.mxu0 0.0
    %2465 = vmatpush2.msra.mxu0 0.0
    %2466 = vmatprep.subr.mxu0 0.0
    %2467 = vmatpush2.msra.mxu0 0.0
    %2468 = vmatprep.subr.mxu0 0.0
    %2469 = vmatpush2.msra.mxu0 0.0
    %2470 = vmatprep.subr.mxu0 0.0
    %2471 = vmatpush2.msra.mxu0 0.0
    %2472 = vmatprep.subr.mxu0 0.0
    %2473 = vmatpush2.msra.mxu0 0.0
    %2474 = vmatprep.subr.mxu0 0.0
    %2475 = vmatpush2.msra.mxu0 0.0
    %2476 = vmatprep.mubr.f32.mxu0 0.0
    %v2477 = vand.u32 %v107, 4294901760
    %v2478 = vsub.f32 %v107, %v2477
    %2479 = vmatmul.mubr.f32.gmra.mxu0 %v2478
    %v2480 = vpop.f32.mrf.mxu0
    %v2481 = vadd.f32 %v2388, %v2480
    %v2482 = vpop.f32.mrf.mxu0
    %v2483 = vadd.f32 %v2390, %v2482
    %2484 = vdwg.mxu0
    %2485 = vmatprep.subr.mxu0 0.0
    %2486 = vmatpush1.msra.mxu0 0.0
    %2487 = vmatprep.subr.mxu0 0.0
    %2488 = vmatpush1.msra.mxu0 0.0
    %2489 = vmatprep.subr.mxu0 0.0
    %2490 = vmatpush1.msra.mxu0 0.0
    %2491 = vmatprep.subr.mxu0 0.0
    %2492 = vmatpush1.msra.mxu0 0.0
    %2493 = vmatprep.subr.mxu0 0.0
    %2494 = vmatpush1.msra.mxu0 0.0
    %2495 = vmatprep.subr.mxu0 0.0
    %2496 = vmatpush1.msra.mxu0 0.0
    %2497 = vmatprep.subr.mxu0 0.0
    %2498 = vmatpush1.msra.mxu0 0.0
    %2499 = vmatprep.subr.mxu0 0.0
    %2500 = vmatpush1.msra.mxu0 0.0
    %2501 = vmatprep.subr.mxu0 0.0
    %2502 = vmatpush1.msra.mxu0 0.0
    %2503 = vmatprep.subr.mxu0 0.0
    %2504 = vmatpush1.msra.mxu0 0.0
    %2505 = vmatprep.subr.mxu0 0.0
    %2506 = vmatpush1.msra.mxu0 0.0
    %v2507 = vand.u32 %v2183, 4294901760
    %2508 = vmatprep.subr.mxu0 %v2507
    %v2509 = vand.u32 %v2182, 4294901760
    %2510 = vmatpush1.msra.mxu0 %v2509
    %v2511 = vand.u32 %v2181, 4294901760
    %2512 = vmatprep.subr.mxu0 %v2511
    %v2513 = vand.u32 %v2180, 4294901760
    %2514 = vmatpush1.msra.mxu0 %v2513
    %v2515 = vand.u32 %v2179, 4294901760
    %2516 = vmatprep.subr.mxu0 %v2515
    %v2517 = vand.u32 %v2178, 4294901760
    %2518 = vmatpush1.msra.mxu0 %v2517
    %v2519 = vand.u32 %v2177, 4294901760
    %2520 = vmatprep.subr.mxu0 %v2519
    %v2521 = vand.u32 %v2176, 4294901760
    %2522 = vmatpush1.msra.mxu0 %v2521
    %v2523 = vand.u32 %v2175, 4294901760
    %2524 = vmatprep.subr.mxu0 %v2523
    %v2525 = vand.u32 %v2174, 4294901760
    %2526 = vmatpush1.msra.mxu0 %v2525
    %2527 = vmatprep.subr.mxu0 0.0
    %2528 = vmatpush2.msra.mxu0 0.0
    %2529 = vmatprep.subr.mxu0 0.0
    %2530 = vmatpush2.msra.mxu0 0.0
    %2531 = vmatprep.subr.mxu0 0.0
    %2532 = vmatpush2.msra.mxu0 0.0
    %2533 = vmatprep.subr.mxu0 0.0
    %2534 = vmatpush2.msra.mxu0 0.0
    %2535 = vmatprep.subr.mxu0 0.0
    %2536 = vmatpush2.msra.mxu0 0.0
    %2537 = vmatprep.subr.mxu0 0.0
    %2538 = vmatpush2.msra.mxu0 0.0
    %2539 = vmatprep.subr.mxu0 0.0
    %2540 = vmatpush2.msra.mxu0 0.0
    %2541 = vmatprep.subr.mxu0 0.0
    %2542 = vmatpush2.msra.mxu0 0.0
    %2543 = vmatprep.subr.mxu0 0.0
    %2544 = vmatpush2.msra.mxu0 0.0
    %2545 = vmatprep.subr.mxu0 0.0
    %2546 = vmatpush2.msra.mxu0 0.0
    %2547 = vmatprep.subr.mxu0 0.0
    %2548 = vmatpush2.msra.mxu0 0.0
    %2549 = vmatprep.subr.mxu0 0.0
    %2550 = vmatpush2.msra.mxu0 0.0
    %2551 = vmatprep.subr.mxu0 0.0
    %2552 = vmatpush2.msra.mxu0 0.0
    %2553 = vmatprep.subr.mxu0 0.0
    %2554 = vmatpush2.msra.mxu0 0.0
    %2555 = vmatprep.subr.mxu0 0.0
    %2556 = vmatpush2.msra.mxu0 0.0
    %2557 = vmatprep.subr.mxu0 0.0
    %2558 = vmatpush2.msra.mxu0 0.0
    %2559 = vmatprep.mubr.f32.mxu0 0.0
    %v2560 = vand.u32 %v107, 4294901760
    %v2561 = vsub.f32 %v107, %v2560
    %v2562 = vand.u32 %v2561, 4294901760
    %2563 = vmatmul.mubr.f32.gmra.mxu0 %v2562
    %v2564 = vpop.f32.mrf.mxu0
    %v2565 = vadd.f32 %v2481, %v2564
    %v2566 = vpop.f32.mrf.mxu0
    %v2567 = vadd.f32 %v2483, %v2566
    %2568 = vdwg.mxu0
    %2569 = vmatprep.subr.mxu0 0.0
    %2570 = vmatpush1.msra.mxu0 0.0
    %2571 = vmatprep.subr.mxu0 0.0
    %2572 = vmatpush1.msra.mxu0 0.0
    %2573 = vmatprep.subr.mxu0 0.0
    %2574 = vmatpush1.msra.mxu0 0.0
    %2575 = vmatprep.subr.mxu0 0.0
    %2576 = vmatpush1.msra.mxu0 0.0
    %2577 = vmatprep.subr.mxu0 0.0
    %2578 = vmatpush1.msra.mxu0 0.0
    %2579 = vmatprep.subr.mxu0 0.0
    %2580 = vmatpush1.msra.mxu0 0.0
    %2581 = vmatprep.subr.mxu0 0.0
    %2582 = vmatpush1.msra.mxu0 0.0
    %2583 = vmatprep.subr.mxu0 0.0
    %2584 = vmatpush1.msra.mxu0 0.0
    %2585 = vmatprep.subr.mxu0 0.0
    %2586 = vmatpush1.msra.mxu0 0.0
    %2587 = vmatprep.subr.mxu0 0.0
    %2588 = vmatpush1.msra.mxu0 0.0
    %2589 = vmatprep.subr.mxu0 0.0
    %2590 = vmatpush1.msra.mxu0 0.0
    %v2591 = vand.u32 %v2183, 4294901760
    %v2592 = vsub.f32 %v2183, %v2591
    %v2593 = vand.u32 %v2592, 4294901760
    %2594 = vmatprep.subr.mxu0 %v2593
    %v2595 = vand.u32 %v2182, 4294901760
    %v2596 = vsub.f32 %v2182, %v2595
    %v2597 = vand.u32 %v2596, 4294901760
    %2598 = vmatpush1.msra.mxu0 %v2597
    %v2599 = vand.u32 %v2181, 4294901760
    %v2600 = vsub.f32 %v2181, %v2599
    %v2601 = vand.u32 %v2600, 4294901760
    %2602 = vmatprep.subr.mxu0 %v2601
    %v2603 = vand.u32 %v2180, 4294901760
    %v2604 = vsub.f32 %v2180, %v2603
    %v2605 = vand.u32 %v2604, 4294901760
    %2606 = vmatpush1.msra.mxu0 %v2605
    %v2607 = vand.u32 %v2179, 4294901760
    %v2608 = vsub.f32 %v2179, %v2607
    %v2609 = vand.u32 %v2608, 4294901760
    %2610 = vmatprep.subr.mxu0 %v2609
    %v2611 = vand.u32 %v2178, 4294901760
    %v2612 = vsub.f32 %v2178, %v2611
    %v2613 = vand.u32 %v2612, 4294901760
    %2614 = vmatpush1.msra.mxu0 %v2613
    %v2615 = vand.u32 %v2177, 4294901760
    %v2616 = vsub.f32 %v2177, %v2615
    %v2617 = vand.u32 %v2616, 4294901760
    %2618 = vmatprep.subr.mxu0 %v2617
    %v2619 = vand.u32 %v2176, 4294901760
    %v2620 = vsub.f32 %v2176, %v2619
    %v2621 = vand.u32 %v2620, 4294901760
    %2622 = vmatpush1.msra.mxu0 %v2621
    %v2623 = vand.u32 %v2175, 4294901760
    %v2624 = vsub.f32 %v2175, %v2623
    %v2625 = vand.u32 %v2624, 4294901760
    %2626 = vmatprep.subr.mxu0 %v2625
    %v2627 = vand.u32 %v2174, 4294901760
    %v2628 = vsub.f32 %v2174, %v2627
    %v2629 = vand.u32 %v2628, 4294901760
    %2630 = vmatpush1.msra.mxu0 %v2629
    %2631 = vmatprep.subr.mxu0 0.0
    %2632 = vmatpush2.msra.mxu0 0.0
    %2633 = vmatprep.subr.mxu0 0.0
    %2634 = vmatpush2.msra.mxu0 0.0
    %2635 = vmatprep.subr.mxu0 0.0
    %2636 = vmatpush2.msra.mxu0 0.0
    %2637 = vmatprep.subr.mxu0 0.0
    %2638 = vmatpush2.msra.mxu0 0.0
    %2639 = vmatprep.subr.mxu0 0.0
    %2640 = vmatpush2.msra.mxu0 0.0
    %2641 = vmatprep.subr.mxu0 0.0
    %2642 = vmatpush2.msra.mxu0 0.0
    %2643 = vmatprep.subr.mxu0 0.0
    %2644 = vmatpush2.msra.mxu0 0.0
    %2645 = vmatprep.subr.mxu0 0.0
    %2646 = vmatpush2.msra.mxu0 0.0
    %2647 = vmatprep.subr.mxu0 0.0
    %2648 = vmatpush2.msra.mxu0 0.0
    %2649 = vmatprep.subr.mxu0 0.0
    %2650 = vmatpush2.msra.mxu0 0.0
    %2651 = vmatprep.subr.mxu0 0.0
    %2652 = vmatpush2.msra.mxu0 0.0
    %2653 = vmatprep.subr.mxu0 0.0
    %2654 = vmatpush2.msra.mxu0 0.0
    %2655 = vmatprep.subr.mxu0 0.0
    %2656 = vmatpush2.msra.mxu0 0.0
    %2657 = vmatprep.subr.mxu0 0.0
    %2658 = vmatpush2.msra.mxu0 0.0
    %2659 = vmatprep.subr.mxu0 0.0
    %2660 = vmatpush2.msra.mxu0 0.0
    %2661 = vmatprep.subr.mxu0 0.0
    %2662 = vmatpush2.msra.mxu0 0.0
    %2663 = vmatprep.mubr.f32.mxu0 0.0
    %v2664 = vand.u32 %v107, 4294901760
    %2665 = vmatmul.mubr.f32.gmra.mxu0 %v2664
    %v2666 = vpop.f32.mrf.mxu0
    %v2667 = vadd.f32 %v2565, %v2666
    %v2668 = vpop.f32.mrf.mxu0
    %v2669 = vadd.f32 %v2567, %v2668
    %2670 = vdwg.mxu0
    %2671 = vmatprep.subr.mxu0 0.0
    %2672 = vmatpush1.msra.mxu0 0.0
    %2673 = vmatprep.subr.mxu0 0.0
    %2674 = vmatpush1.msra.mxu0 0.0
    %2675 = vmatprep.subr.mxu0 0.0
    %2676 = vmatpush1.msra.mxu0 0.0
    %2677 = vmatprep.subr.mxu0 0.0
    %2678 = vmatpush1.msra.mxu0 0.0
    %2679 = vmatprep.subr.mxu0 0.0
    %2680 = vmatpush1.msra.mxu0 0.0
    %2681 = vmatprep.subr.mxu0 0.0
    %2682 = vmatpush1.msra.mxu0 0.0
    %2683 = vmatprep.subr.mxu0 0.0
    %2684 = vmatpush1.msra.mxu0 0.0
    %2685 = vmatprep.subr.mxu0 0.0
    %2686 = vmatpush1.msra.mxu0 0.0
    %2687 = vmatprep.subr.mxu0 0.0
    %2688 = vmatpush1.msra.mxu0 0.0
    %2689 = vmatprep.subr.mxu0 0.0
    %2690 = vmatpush1.msra.mxu0 0.0
    %2691 = vmatprep.subr.mxu0 0.0
    %2692 = vmatpush1.msra.mxu0 0.0
    %v2693 = vand.u32 %v2183, 4294901760
    %2694 = vmatprep.subr.mxu0 %v2693
    %v2695 = vand.u32 %v2182, 4294901760
    %2696 = vmatpush1.msra.mxu0 %v2695
    %v2697 = vand.u32 %v2181, 4294901760
    %2698 = vmatprep.subr.mxu0 %v2697
    %v2699 = vand.u32 %v2180, 4294901760
    %2700 = vmatpush1.msra.mxu0 %v2699
    %v2701 = vand.u32 %v2179, 4294901760
    %2702 = vmatprep.subr.mxu0 %v2701
    %v2703 = vand.u32 %v2178, 4294901760
    %2704 = vmatpush1.msra.mxu0 %v2703
    %v2705 = vand.u32 %v2177, 4294901760
    %2706 = vmatprep.subr.mxu0 %v2705
    %v2707 = vand.u32 %v2176, 4294901760
    %2708 = vmatpush1.msra.mxu0 %v2707
    %v2709 = vand.u32 %v2175, 4294901760
    %2710 = vmatprep.subr.mxu0 %v2709
    %v2711 = vand.u32 %v2174, 4294901760
    %2712 = vmatpush1.msra.mxu0 %v2711
    %2713 = vmatprep.subr.mxu0 0.0
    %2714 = vmatpush2.msra.mxu0 0.0
    %2715 = vmatprep.subr.mxu0 0.0
    %2716 = vmatpush2.msra.mxu0 0.0
    %2717 = vmatprep.subr.mxu0 0.0
    %2718 = vmatpush2.msra.mxu0 0.0
    %2719 = vmatprep.subr.mxu0 0.0
    %2720 = vmatpush2.msra.mxu0 0.0
    %2721 = vmatprep.subr.mxu0 0.0
    %2722 = vmatpush2.msra.mxu0 0.0
    %2723 = vmatprep.subr.mxu0 0.0
    %2724 = vmatpush2.msra.mxu0 0.0
    %2725 = vmatprep.subr.mxu0 0.0
    %2726 = vmatpush2.msra.mxu0 0.0
    %2727 = vmatprep.subr.mxu0 0.0
    %2728 = vmatpush2.msra.mxu0 0.0
    %2729 = vmatprep.subr.mxu0 0.0
    %2730 = vmatpush2.msra.mxu0 0.0
    %2731 = vmatprep.subr.mxu0 0.0
    %2732 = vmatpush2.msra.mxu0 0.0
    %2733 = vmatprep.subr.mxu0 0.0
    %2734 = vmatpush2.msra.mxu0 0.0
    %2735 = vmatprep.subr.mxu0 0.0
    %2736 = vmatpush2.msra.mxu0 0.0
    %2737 = vmatprep.subr.mxu0 0.0
    %2738 = vmatpush2.msra.mxu0 0.0
    %2739 = vmatprep.subr.mxu0 0.0
    %2740 = vmatpush2.msra.mxu0 0.0
    %2741 = vmatprep.subr.mxu0 0.0
    %2742 = vmatpush2.msra.mxu0 0.0
    %2743 = vmatprep.subr.mxu0 0.0
    %2744 = vmatpush2.msra.mxu0 0.0
    %2745 = vmatprep.mubr.f32.mxu0 0.0
    %v2746 = vand.u32 %v107, 4294901760
    %2747 = vmatmul.mubr.f32.gmra.mxu0 %v2746
    %v2748 = vpop.f32.mrf.mxu0
    %v2749 = vadd.f32 %v2667, %v2748
    %v2750 = vpop.f32.mrf.mxu0
    %v2751 = vadd.f32 %v2669, %v2750
    %2752 = vdwg.mxu0
    %v2753 = vadd.f32 %v2170, %v2749
    %v2754 = vadd.f32 %v2172, %v2751
    %v2757 = vcombine.low %v2753, %v2754
    %v2759 = vunpack.c.l.s4 1983009808
    %v2760 = vunpack.c.0.s8 %v2759
    %v2761 = vlaneseq
    %v2762 = vshrl.u32 %v2761, 7
    %v2763 = vsub.s32 %v2760, %v2762
    %v2764 = vrot.slane %v2757, %v2763
    %2766 = vst [vmem:[#allocation12] sm:$0xf] %v2764
    %v2769 = vcombine.low %v2170, %v2172
    %v2771 = vunpack.c.l.s4 1983009808
    %v2772 = vunpack.c.0.s8 %v2771
    %v2773 = vlaneseq
    %v2774 = vshrl.u32 %v2773, 7
    %v2775 = vsub.s32 %v2772, %v2774
    %v2776 = vrot.slane %v2769, %v2775
    %2778 = vst [vmem:[#allocation13] sm:$0xf] %v2776
    %2779 = vst [vmem:[#allocation15] sm:$0x3] %v1286
    // Predicated region
    $region50: #{tpu_custom_call.1} parent=1 // pred_check
      _
    $region51: #{tpu_custom_call.1} parent=1 // pred_check_branch
      %2781 = sbr.rel (0) target = $region53
    $region52: #{tpu_custom_call.1} parent=1 // pred_region
      %s2783 = ssub.s32 64, 64
      %2784 = vsyncadd [#allocation5], %s2783
      %s2786 = sshll.u32 [#allocation12], 4
      %s2787 = int_to_ptr.vmem [resolvable:$true] %s2786
      %2789 = dma.vmem_to_hbm [thread:$0]  %s2787, 64, %s7, [#allocation5]
    $region53: #{tpu_custom_call.1} parent=1 // pred_fallthru
      _
    // Predicated region
    $region54: #{tpu_custom_call.1} parent=1 // pred_check
      _
    $region55: #{tpu_custom_call.1} parent=1 // pred_check_branch
      %2791 = sbr.rel (0) target = $region57
    $region56: #{tpu_custom_call.1} parent=1 // pred_region
      %s2793 = ssub.s32 64, 64
      %2794 = vsyncadd [#allocation14], %s2793
      %s2796 = sshll.u32 [#allocation13], 4
      %s2797 = int_to_ptr.vmem [resolvable:$true] %s2796
      %2799 = dma.vmem_to_hbm [thread:$0]  %s2797, 64, %s8, [#allocation14]
    $region57: #{tpu_custom_call.1} parent=1 // pred_fallthru
      _
    // Predicated region
    $region58: #{tpu_custom_call.1} parent=1 // pred_check
      _
    $region59: #{tpu_custom_call.1} parent=1 // pred_check_branch
      %2801 = sbr.rel (0) target = $region61
    $region60: #{tpu_custom_call.1} parent=1 // pred_region
      %s2803 = ssub.s32 32, 32
      %2804 = vsyncadd [#allocation14], %s2803
      %s2806 = sshll.u32 [#allocation15], 4
      %s2807 = int_to_ptr.vmem [resolvable:$true] %s2806
      %2809 = dma.vmem_to_hbm [thread:$0]  %s2807, 32, %s9, [#allocation14]
    $region61: #{tpu_custom_call.1} parent=1 // pred_fallthru
      _
    // Predicated region
    $region62: #{tpu_custom_call.1} parent=1 // pred_check
      _
    $region63: #{tpu_custom_call.1} parent=1 // pred_check_branch
      %2811 = sbr.rel (0) target = $region65
    $region64: #{tpu_custom_call.1} parent=1 // pred_region
      %2812 = dma.done [#allocation5], 64
    $region65: #{tpu_custom_call.1} parent=1 // pred_fallthru
      _
    // Predicated region
    $region66: #{tpu_custom_call.1} parent=1 // pred_check
      _
    $region67: #{tpu_custom_call.1} parent=1 // pred_check_branch
      %2814 = sbr.rel (0) target = $region69
    $region68: #{tpu_custom_call.1} parent=1 // pred_region
      %2815 = dma.done [#allocation14], 64
    $region69: #{tpu_custom_call.1} parent=1 // pred_fallthru
      _
    // Predicated region
    $region70: #{tpu_custom_call.1} parent=1 // pred_check
      _
    $region71: #{tpu_custom_call.1} parent=1 // pred_check_branch
      %2817 = sbr.rel (0) target = $region73
    $region72: #{tpu_custom_call.1} parent=1 // pred_region
      %2818 = dma.done [#allocation14], 32
    $region73: #{tpu_custom_call.1} parent=1 // pred_fallthru
      _
    %2819 = vsyncpa [#allocation4], 1
    %2820 = vsyncpa [#allocation7], 1
    %2821 = vsyncpa [#allocation10], 1
    %2822 = vsyncpa [#allocation5], 1
    %2823 = vsyncpa [#allocation14], 1

</llo_original>
